<compile_context>
chip_gen: v7x
topology: tpu7x:2x2x1
jax: 0.10.0
libtpu: 0.0.40
codegen_flags: <defaults>
</compile_context>

<pallas_src>
from functools import partial

import jax
import jax.numpy as jnp
from jax.experimental import pallas as pl
from jax.experimental.pallas import tpu as pltpu

IN_DIM = 2048
H1 = 256
H2 = 128
OUT_DIM = 64      # out_dim argument of TripletNetwork


def mlp_kernel(x_ref, w1_ref, b1_ref, w2_ref, b2_ref, w3_ref, b3_ref,
               o_ref, h1_ref):
    # fc1 + ReLU : cast the f32 x tile to bf16 in-register (no HBM round trip),
    # MXU matmul with f32 accumulation, stage the activation as bf16 in VMEM.
    x_bf16 = x_ref[...].astype(jnp.bfloat16)
    h1 = jnp.dot(x_bf16, w1_ref[...], preferred_element_type=jnp.float32)
    h1_ref[...] = jnp.maximum(h1 + b1_ref[...], 0.0).astype(h1_ref.dtype)

    # fc2 + ReLU : h2 stays in vregs as bf16 (small; no scratch round trip).
    h2 = jnp.dot(h1_ref[...], w2_ref[...], preferred_element_type=jnp.float32)
    h2_bf16 = jnp.maximum(h2 + b2_ref[...], 0.0).astype(jnp.bfloat16)

    # fc3 (no activation), lane-padded f32 output store.
    out = jnp.dot(h2_bf16, w3_ref[...], preferred_element_type=jnp.float32)
    o_ref[...] = (out + b3_ref[...]).astype(o_ref.dtype)


def _round_up(x, m):
    return ((x + m - 1) // m) * m


def _choose_tm(batch):
    # Fill the MXU M dimension while keeping enough grid steps:
    #   * B >= 2048      -> TM=512 (grid >= 4; halves per-step overhead vs 256)
    #   * 512 <= B < 2048 -> ~B/4 rounded to 8 (>= 4 steps => >= 2 per v7x TC)
    #   * 256 <= B < 512  -> TM=128 (2-4 steps)
    #   * B < 256         -> single round-to-8 tile
    if batch >= 2048:
        return 512
    if batch >= 512:
        return min(512, max(128, _round_up(pl.cdiv(batch, 4), 8)))
    if batch >= 256:
        return 128
    return max(8, _round_up(batch, 8))


def prepare_triplet_params(w1, b1, w2, b2, w3, b3):
    """One-time parameter prep: bf16 weights, lane-padded fc3. Call once,
    reuse across forward calls so no per-call cast/pad HBM traffic remains."""
    out_dim = w3.shape[1]
    out_pad = pl.cdiv(out_dim, 128) * 128
    w3p = jnp.pad(w3, ((0, 0), (0, out_pad - out_dim)))
    b3p = jnp.pad(b3, ((0, 0), (0, out_pad - out_dim)))
    return (w1.astype(jnp.bfloat16), b1.astype(jnp.float32),
            w2.astype(jnp.bfloat16), b2.astype(jnp.float32),
            w3p.astype(jnp.bfloat16), b3p.astype(jnp.float32)), out_dim


@partial(jax.jit, static_argnames=("out_dim",))
def triplet_network_forward(x, w1, b1, w2, b2, w3p, b3p, *, out_dim):
    """x: (B, 2048) f32.  w1/w2/w3p are bf16, w3p/b3p already lane-padded
    (use prepare_triplet_params)."""
    B = x.shape[0]
    out_pad = w3p.shape[1]                      # multiple of 128 (unmasked vst)

    tm = _choose_tm(B)
    b_pad = pl.cdiv(B, tm) * tm
    grid = (b_pad // tm,)

    if b_pad != B:                              # zero-pad batch only when needed
        x = jnp.pad(x, ((0, b_pad - B), (0, 0)))

    out = pl.pallas_call(
        mlp_kernel,
        out_shape=jax.ShapeDtypeStruct((b_pad, out_pad), jnp.float32),
        grid_spec=pltpu.PrefetchScalarGridSpec(
            num_scalar_prefetch=0,
            grid=grid,
            in_specs=[
                pl.BlockSpec((tm, IN_DIM), lambda i: (i, 0)),    # x tile (f32)
                pl.BlockSpec((IN_DIM, H1), lambda i: (0, 0)),    # W1 (resident)
                pl.BlockSpec((1, H1), lambda i: (0, 0)),         # b1
                pl.BlockSpec((H1, H2), lambda i: (0, 0)),        # W2 (resident)
                pl.BlockSpec((1, H2), lambda i: (0, 0)),         # b2
                pl.BlockSpec((H2, out_pad), lambda i: (0, 0)),   # W3 (resident)
                pl.BlockSpec((1, out_pad), lambda i: (0, 0)),    # b3
            ],
            out_specs=pl.BlockSpec((tm, out_pad), lambda i: (i, 0)),
            scratch_shapes=[
                pltpu.VMEM((tm, H1), jnp.bfloat16),   # h1 staging (bf16)
            ],
        ),
        compiler_params=pltpu.CompilerParams(
            dimension_semantics=("parallel",),
            vmem_limit_bytes=32 * 1024 * 1024,
        ),
    )(x, w1, b1, w2, b2, w3p, b3p)

    if b_pad == B and out_pad == out_dim:
        return out
    return out[:B, :out_dim]


def init_linear(key, fan_in, fan_out, dtype=jnp.float32):
    # PyTorch nn.Linear default init: U(-1/sqrt(fan_in), 1/sqrt(fan_in))
    kw, kb = jax.random.split(key)
    bound = 1.0 / (fan_in ** 0.5)
    w = jax.random.uniform(kw, (fan_in, fan_out), dtype, -bound, bound)
    b = jax.random.uniform(kb, (1, fan_out), dtype, -bound, bound)
    return w, b


if __name__ == "__main__":
    key = jax.random.PRNGKey(0)
    k_x, k1, k2, k3 = jax.random.split(key, 4)

    B = 8  # small demo batch (anchor / positive / negative rows would live here)
    x = jax.random.normal(k_x, (B, IN_DIM), jnp.float32)

    w1, b1 = init_linear(k1, IN_DIM, H1)
    w2, b2 = init_linear(k2, H1, H2)
    w3, b3 = init_linear(k3, H2, OUT_DIM)

    # One-time parameter prep (bf16 cast + fc3 lane padding) outside the jit.
    (w1b, b1f, w2b, b2f, w3pb, b3pf), out_dim = prepare_triplet_params(
        w1, b1, w2, b2, w3, b3)

    out = triplet_network_forward(x, w1b, b1f, w2b, b2f, w3pb, b3pf,
                                  out_dim=out_dim)
    jax.block_until_ready(out)
    assert out.shape == (B, OUT_DIM)

    # Reference in plain JAX using the same bf16-operand / f32-accumulate recipe.
    bf16 = jnp.bfloat16
    h = jnp.maximum(jnp.dot(x.astype(bf16), w1.astype(bf16),
                            preferred_element_type=jnp.float32) + b1, 0.0)
    h = jnp.maximum(jnp.dot(h.astype(bf16), w2.astype(bf16),
                            preferred_element_type=jnp.float32) + b2, 0.0)
    ref = jnp.dot(h.astype(bf16), w3.astype(bf16),
                  preferred_element_type=jnp.float32) + b3
    assert jnp.allclose(out, ref, atol=1e-2, rtol=1e-2)

    print("KERNEL_OK")
</pallas_src>

<mosaic_0001>
module attributes {stable_mosaic.version = 11 : i64} {
  func.func @mlp_kernel(%arg0: i32, %arg1: memref<8x2048xf32, #tpu.memory_space<vmem>>, %arg2: memref<2048x256xbf16, #tpu.memory_space<vmem>>, %arg3: memref<1x256xf32, #tpu.memory_space<vmem>>, %arg4: memref<256x128xbf16, #tpu.memory_space<vmem>>, %arg5: memref<1x128xf32, #tpu.memory_space<vmem>>, %arg6: memref<128x128xbf16, #tpu.memory_space<vmem>>, %arg7: memref<1x128xf32, #tpu.memory_space<vmem>>, %arg8: memref<8x128xf32, #tpu.memory_space<vmem>>, %arg9: memref<8x256xbf16, #tpu.memory_space<vmem>>) attributes {dimension_semantics = [#tpu.dimension_semantics<parallel>], iteration_bounds = array<i64: 1>, scalar_prefetch = 0 : i64, scratch_operands = 1 : i64, tpu.core_type = #tpu.core_type<tc>, window_params = [{transform_indices = @transform_0, window_bounds = array<i64: 8, 2048>}, {pipeline_mode = #tpu.pipeline_mode<synchronous>, transform_indices = @transform_1, window_bounds = array<i64: 2048, 256>}, {pipeline_mode = #tpu.pipeline_mode<synchronous>, transform_indices = @transform_2, window_bounds = array<i64: 1, 256>}, {pipeline_mode = #tpu.pipeline_mode<synchronous>, transform_indices = @transform_3, window_bounds = array<i64: 256, 128>}, {pipeline_mode = #tpu.pipeline_mode<synchronous>, transform_indices = @transform_4, window_bounds = array<i64: 1, 128>}, {pipeline_mode = #tpu.pipeline_mode<synchronous>, transform_indices = @transform_5, window_bounds = array<i64: 128, 128>}, {pipeline_mode = #tpu.pipeline_mode<synchronous>, transform_indices = @transform_6, window_bounds = array<i64: 1, 128>}, {transform_indices = @transform_7, window_bounds = array<i64: 8, 128>}]} {
    %c0 = arith.constant 0 : index
    %c0_0 = arith.constant 0 : index
    %0 = vector.load %arg1[%c0, %c0_0] : memref<8x2048xf32, #tpu.memory_space<vmem>>, vector<8x2048xf32>
    %1 = arith.truncf %0 : vector<8x2048xf32> to vector<8x2048xbf16>
    %c0_1 = arith.constant 0 : index
    %c0_2 = arith.constant 0 : index
    %2 = vector.load %arg2[%c0_1, %c0_2] : memref<2048x256xbf16, #tpu.memory_space<vmem>>, vector<2048x256xbf16>
    %cst = arith.constant dense<0.000000e+00> : vector<8x256xf32>
    %3 = tpu.matmul %1, %2, %cst {dimension_numbers = #tpu.dot_dimension_numbers<[1], [0], [0], [1], [0, 0, 1, 1], [], []>} : vector<8x2048xbf16>, vector<2048x256xbf16>, vector<8x256xf32> -> vector<8x256xf32>
    %c0_3 = arith.constant 0 : index
    %c0_4 = arith.constant 0 : index
    %4 = vector.load %arg3[%c0_3, %c0_4] : memref<1x256xf32, #tpu.memory_space<vmem>>, vector<1x256xf32>
    %5 = vector.broadcast %4 : vector<1x256xf32> to vector<8x256xf32>
    %6 = arith.addf %3, %5 : vector<8x256xf32>
    %cst_5 = arith.constant 0.000000e+00 : f32
    %7 = vector.broadcast %cst_5 : f32 to vector<8x256xf32>
    %8 = arith.maximumf %6, %7 : vector<8x256xf32>
    %9 = arith.truncf %8 : vector<8x256xf32> to vector<8x256xbf16>
    %c0_6 = arith.constant 0 : index
    %c0_7 = arith.constant 0 : index
    %10 = vector.load %arg9[%c0_6, %c0_7] : memref<8x256xbf16, #tpu.memory_space<vmem>>, vector<8x256xbf16>
    tpu.vector_store %arg9[%c0_6, %c0_7], %9 {strides = array<i32>} : memref<8x256xbf16, #tpu.memory_space<vmem>>, vector<8x256xbf16>,
    %c0_8 = arith.constant 0 : index
    %c0_9 = arith.constant 0 : index
    %11 = vector.load %arg9[%c0_8, %c0_9] : memref<8x256xbf16, #tpu.memory_space<vmem>>, vector<8x256xbf16>
    %c0_10 = arith.constant 0 : index
    %c0_11 = arith.constant 0 : index
    %12 = vector.load %arg4[%c0_10, %c0_11] : memref<256x128xbf16, #tpu.memory_space<vmem>>, vector<256x128xbf16>
    %cst_12 = arith.constant dense<0.000000e+00> : vector<8x128xf32>
    %13 = tpu.matmul %11, %12, %cst_12 {dimension_numbers = #tpu.dot_dimension_numbers<[1], [0], [0], [1], [0, 0, 1, 1], [], []>} : vector<8x256xbf16>, vector<256x128xbf16>, vector<8x128xf32> -> vector<8x128xf32>
    %c0_13 = arith.constant 0 : index
    %c0_14 = arith.constant 0 : index
    %14 = vector.load %arg5[%c0_13, %c0_14] : memref<1x128xf32, #tpu.memory_space<vmem>>, vector<1x128xf32>
    %15 = vector.broadcast %14 : vector<1x128xf32> to vector<8x128xf32>
    %16 = arith.addf %13, %15 : vector<8x128xf32>
    %cst_15 = arith.constant 0.000000e+00 : f32
    %17 = vector.broadcast %cst_15 : f32 to vector<8x128xf32>
    %18 = arith.maximumf %16, %17 : vector<8x128xf32>
    %19 = arith.truncf %18 : vector<8x128xf32> to vector<8x128xbf16>
    %c0_16 = arith.constant 0 : index
    %c0_17 = arith.constant 0 : index
    %20 = vector.load %arg6[%c0_16, %c0_17] : memref<128x128xbf16, #tpu.memory_space<vmem>>, vector<128x128xbf16>
    %cst_18 = arith.constant dense<0.000000e+00> : vector<8x128xf32>
    %21 = tpu.matmul %19, %20, %cst_18 {dimension_numbers = #tpu.dot_dimension_numbers<[1], [0], [0], [1], [0, 0, 1, 1], [], []>} : vector<8x128xbf16>, vector<128x128xbf16>, vector<8x128xf32> -> vector<8x128xf32>
    %c0_19 = arith.constant 0 : index
    %c0_20 = arith.constant 0 : index
    %22 = vector.load %arg7[%c0_19, %c0_20] : memref<1x128xf32, #tpu.memory_space<vmem>>, vector<1x128xf32>
    %23 = vector.broadcast %22 : vector<1x128xf32> to vector<8x128xf32>
    %24 = arith.addf %21, %23 : vector<8x128xf32>
    %c0_21 = arith.constant 0 : index
    %c0_22 = arith.constant 0 : index
    %25 = vector.load %arg8[%c0_21, %c0_22] : memref<8x128xf32, #tpu.memory_space<vmem>>, vector<8x128xf32>
    tpu.vector_store %arg8[%c0_21, %c0_22], %24 {strides = array<i32>} : memref<8x128xf32, #tpu.memory_space<vmem>>, vector<8x128xf32>,
    return
  }
  func.func @transform_0(%arg0: i32) -> (i32, i32) {
    %c0_i32 = arith.constant 0 : i32
    %c0_i32_0 = arith.constant 0 : i32
    return %arg0, %c0_i32 : i32, i32
  }
  func.func @transform_1(%arg0: i32) -> (i32, i32) {
    %c0_i32 = arith.constant 0 : i32
    %c0_i32_0 = arith.constant 0 : i32
    %c0_i32_1 = arith.constant 0 : i32
    return %c0_i32, %c0_i32_0 : i32, i32
  }
  func.func @transform_2(%arg0: i32) -> (i32, i32) {
    %c0_i32 = arith.constant 0 : i32
    %c0_i32_0 = arith.constant 0 : i32
    %c0_i32_1 = arith.constant 0 : i32
    return %c0_i32, %c0_i32_0 : i32, i32
  }
  func.func @transform_3(%arg0: i32) -> (i32, i32) {
    %c0_i32 = arith.constant 0 : i32
    %c0_i32_0 = arith.constant 0 : i32
    %c0_i32_1 = arith.constant 0 : i32
    return %c0_i32, %c0_i32_0 : i32, i32
  }
  func.func @transform_4(%arg0: i32) -> (i32, i32) {
    %c0_i32 = arith.constant 0 : i32
    %c0_i32_0 = arith.constant 0 : i32
    %c0_i32_1 = arith.constant 0 : i32
    return %c0_i32, %c0_i32_0 : i32, i32
  }
  func.func @transform_5(%arg0: i32) -> (i32, i32) {
    %c0_i32 = arith.constant 0 : i32
    %c0_i32_0 = arith.constant 0 : i32
    %c0_i32_1 = arith.constant 0 : i32
    return %c0_i32, %c0_i32_0 : i32, i32
  }
  func.func @transform_6(%arg0: i32) -> (i32, i32) {
    %c0_i32 = arith.constant 0 : i32
    %c0_i32_0 = arith.constant 0 : i32
    %c0_i32_1 = arith.constant 0 : i32
    return %c0_i32, %c0_i32_0 : i32, i32
  }
  func.func @transform_7(%arg0: i32) -> (i32, i32) {
    %c0_i32 = arith.constant 0 : i32
    %c0_i32_0 = arith.constant 0 : i32
    return %arg0, %c0_i32 : i32, i32
  }
}

</mosaic_0001>

<llo_original>
// kernel: triplet_network_forward.1
$region0: #{triplet_network_forward.1}
  #allocation0 [shape = 'u32[]', space=smem, size = 0x4, offset = 0x4, fixed_abs, tag = 'smem constant byte address 0x4 - core index']
  #allocation1 [shape = 'u32[144,128]{1,0:T(1,128)}', space=vmem, size = 0x12000, scoped, tag = 'internal scratch']
  #allocation2 [shape = 'bf16[8,256]{1,0:T(8,128)(2,1)}', space=vmem, size = 0x1000, scoped, tag = 'scratch operand']
  %s0 = inlined_call_operand.hbm [shape: f32[8,2048], index: 0, kind: input, shape index: {}]
  %s1 = inlined_call_operand.hbm [shape: bf16[2048,256], index: 1, kind: input, shape index: {}]
  %s2 = inlined_call_operand.vmem [shape: f32[1,256], index: 2, kind: input, shape index: {}]
  %s3 = inlined_call_operand.hbm [shape: bf16[256,128], index: 3, kind: input, shape index: {}]
  %s4 = inlined_call_operand.vmem [shape: f32[1,128], index: 4, kind: input, shape index: {}]
  %s5 = inlined_call_operand.hbm [shape: bf16[128,128], index: 5, kind: input, shape index: {}]
  %s6 = inlined_call_operand.vmem [shape: f32[1,128], index: 6, kind: input, shape index: {}]
  %s7 = inlined_call_operand.hbm [shape: f32[8,128], index: 7, kind: output, shape index: {}]
  %s8 = sld [smem:[#allocation0]]
  $region54: #{triplet_network_forward.1} parent=0
    _
  %s10 = ssub.s32 1, %s8
  %s11 = scalar_select 0, %s10, %s8
  $region1: #{triplet_network_forward.1} parent=0
    #allocation3 [shape = 'u8[65536]{0}', space=vmem, size = 0x10000, scoped, tag = 'input window, operand 0, single buffered']
    #allocation4 [shape = 's32[1]{0}', space=sflag, size = 0x4, scoped, tag = 'scoped memory for triplet_network_forward.1']
    #allocation5 [shape = 's32[1]{0}', space=sflag, size = 0x4, scoped, tag = 'scoped memory for triplet_network_forward.1']
    #allocation6 [shape = 'u8[1048576]{0}', space=vmem, size = 0x100000, scoped, tag = 'input window, operand 1, single buffered']
    #allocation7 [shape = 's32[1]{0}', space=sflag, size = 0x4, scoped, tag = 'scoped memory for triplet_network_forward.1']
    #allocation8 [shape = 'u8[65536]{0}', space=vmem, size = 0x10000, scoped, tag = 'input window, operand 3, single buffered']
    #allocation9 [shape = 'u8[32768]{0}', space=vmem, size = 0x8000, scoped, tag = 'input window, operand 5, single buffered']
    #allocation10 [shape = 's32[1]{0}', space=sflag, size = 0x4, scoped, tag = 'scoped memory for triplet_network_forward.1']
    #allocation11 [shape = 'u8[4096]{0}', space=vmem, size = 0x1000, scoped, tag = 'output window, operand 0, single buffered']
    %12 = vsyncpa [#allocation4], 0
    %13 = vsyncpa [#allocation7], 0
    %14 = vsyncpa [#allocation10], 0
    %15 = vsyncpa [#allocation5], 0
    // Predicated region
    $region2: #{triplet_network_forward.1} parent=1 // pred_check
      _
    $region3: #{triplet_network_forward.1} parent=1 // pred_check_branch
      %17 = sbr.rel (0) target = $region5
    $region4: #{triplet_network_forward.1} parent=1 // pred_region
      %s19 = ssub.s32 2048, 2048
      %20 = vsyncadd [#allocation4], %s19
      %s22 = sshll.u32 [#allocation3], 4
      %s23 = int_to_ptr.vmem [resolvable:$true] %s22
      %25 = dma.hbm_to_vmem [thread:$0]  %s0, 2048, %s23, [#allocation4]
    $region5: #{triplet_network_forward.1} parent=1 // pred_fallthru
      _
    // Predicated region
    $region6: #{triplet_network_forward.1} parent=1 // pred_check
      _
    $region7: #{triplet_network_forward.1} parent=1 // pred_check_branch
      %27 = sbr.rel (0) target = $region9
    $region8: #{triplet_network_forward.1} parent=1 // pred_region
      %s29 = ssub.s32 32768, 32768
      %30 = vsyncadd [#allocation7], %s29
      %s31 = sshll.u32 [#allocation6], 4
      %s32 = int_to_ptr.vmem [resolvable:$true] %s31
      %37 = dma.hbm_to_vmem [thread:$0]  %s1, 32768, %s32, [#allocation7], 128, 128, 8
    $region9: #{triplet_network_forward.1} parent=1 // pred_fallthru
      _
    // Predicated region
    $region10: #{triplet_network_forward.1} parent=1 // pred_check
      _
    $region11: #{triplet_network_forward.1} parent=1 // pred_check_branch
      %39 = sbr.rel (0) target = $region13
    $region12: #{triplet_network_forward.1} parent=1 // pred_region
      _
    $region13: #{triplet_network_forward.1} parent=1 // pred_fallthru
      _
    // Predicated region
    $region14: #{triplet_network_forward.1} parent=1 // pred_check
      _
    $region15: #{triplet_network_forward.1} parent=1 // pred_check_branch
      %41 = sbr.rel (0) target = $region17
    $region16: #{triplet_network_forward.1} parent=1 // pred_region
      %s43 = ssub.s32 2048, 2048
      %44 = vsyncadd [#allocation7], %s43
      %s45 = sshll.u32 [#allocation8], 4
      %s46 = int_to_ptr.vmem [resolvable:$true] %s45
      %51 = dma.hbm_to_vmem [thread:$0]  %s3, 2048, %s46, [#allocation7], 64, 64, 4
    $region17: #{triplet_network_forward.1} parent=1 // pred_fallthru
      _
    // Predicated region
    $region18: #{triplet_network_forward.1} parent=1 // pred_check
      _
    $region19: #{triplet_network_forward.1} parent=1 // pred_check_branch
      %53 = sbr.rel (0) target = $region21
    $region20: #{triplet_network_forward.1} parent=1 // pred_region
      _
    $region21: #{triplet_network_forward.1} parent=1 // pred_fallthru
      _
    // Predicated region
    $region22: #{triplet_network_forward.1} parent=1 // pred_check
      _
    $region23: #{triplet_network_forward.1} parent=1 // pred_check_branch
      %55 = sbr.rel (0) target = $region25
    $region24: #{triplet_network_forward.1} parent=1 // pred_region
      %s57 = ssub.s32 1024, 1024
      %58 = vsyncadd [#allocation10], %s57
      %s59 = sshll.u32 [#allocation9], 4
      %s60 = int_to_ptr.vmem [resolvable:$true] %s59
      %65 = dma.hbm_to_vmem [thread:$0]  %s5, 1024, %s60, [#allocation10], 64, 64, 4
    $region25: #{triplet_network_forward.1} parent=1 // pred_fallthru
      _
    // Predicated region
    $region26: #{triplet_network_forward.1} parent=1 // pred_check
      _
    $region27: #{triplet_network_forward.1} parent=1 // pred_check_branch
      %67 = sbr.rel (0) target = $region29
    $region28: #{triplet_network_forward.1} parent=1 // pred_region
      _
    $region29: #{triplet_network_forward.1} parent=1 // pred_fallthru
      _
    // Predicated region
    $region30: #{triplet_network_forward.1} parent=1 // pred_check
      _
    $region31: #{triplet_network_forward.1} parent=1 // pred_check_branch
      %69 = sbr.rel (0) target = $region33
    $region32: #{triplet_network_forward.1} parent=1 // pred_region
      %70 = dma.done [#allocation4], 2048
    $region33: #{triplet_network_forward.1} parent=1 // pred_fallthru
      _
    // Predicated region
    $region34: #{triplet_network_forward.1} parent=1 // pred_check
      _
    $region35: #{triplet_network_forward.1} parent=1 // pred_check_branch
      %72 = sbr.rel (0) target = $region37
    $region36: #{triplet_network_forward.1} parent=1 // pred_region
      %73 = dma.done [#allocation7], 32768
    $region37: #{triplet_network_forward.1} parent=1 // pred_fallthru
      _
    // Predicated region
    $region38: #{triplet_network_forward.1} parent=1 // pred_check
      _
    $region39: #{triplet_network_forward.1} parent=1 // pred_check_branch
      %75 = sbr.rel (0) target = $region41
    $region40: #{triplet_network_forward.1} parent=1 // pred_region
      %76 = dma.done [#allocation7], 2048
    $region41: #{triplet_network_forward.1} parent=1 // pred_fallthru
      _
    // Predicated region
    $region42: #{triplet_network_forward.1} parent=1 // pred_check
      _
    $region43: #{triplet_network_forward.1} parent=1 // pred_check_branch
      %78 = sbr.rel (0) target = $region45
    $region44: #{triplet_network_forward.1} parent=1 // pred_region
      %79 = dma.done [#allocation10], 1024
    $region45: #{triplet_network_forward.1} parent=1 // pred_fallthru
      _
    %v81 = vld [vmem:[#allocation3] sm:$0xff]
    %v82 = vld [vmem:[#allocation3 + $0x8] sm:$0xff]
    %v83 = vld [vmem:[#allocation3 + $0x10] sm:$0xff]
    %v84 = vld [vmem:[#allocation3 + $0x18] sm:$0xff]
    %v85 = vld [vmem:[#allocation3 + $0x20] sm:$0xff]
    %v86 = vld [vmem:[#allocation3 + $0x28] sm:$0xff]
    %v87 = vld [vmem:[#allocation3 + $0x30] sm:$0xff]
    %v88 = vld [vmem:[#allocation3 + $0x38] sm:$0xff]
    %v89 = vld [vmem:[#allocation3 + $0x40] sm:$0xff]
    %v90 = vld [vmem:[#allocation3 + $0x48] sm:$0xff]
    %v91 = vld [vmem:[#allocation3 + $0x50] sm:$0xff]
    %v92 = vld [vmem:[#allocation3 + $0x58] sm:$0xff]
    %v93 = vld [vmem:[#allocation3 + $0x60] sm:$0xff]
    %v94 = vld [vmem:[#allocation3 + $0x68] sm:$0xff]
    %v95 = vld [vmem:[#allocation3 + $0x70] sm:$0xff]
    %v96 = vld [vmem:[#allocation3 + $0x78] sm:$0xff]
    %v97 = vpack.c.bf16 %v81, %v81
    %v98 = vpack.c.bf16 %v82, %v82
    %v99 = vpack.c.bf16 %v83, %v83
    %v100 = vpack.c.bf16 %v84, %v84
    %v101 = vpack.c.bf16 %v85, %v85
    %v102 = vpack.c.bf16 %v86, %v86
    %v103 = vpack.c.bf16 %v87, %v87
    %v104 = vpack.c.bf16 %v88, %v88
    %v105 = vpack.c.bf16 %v89, %v89
    %v106 = vpack.c.bf16 %v90, %v90
    %v107 = vpack.c.bf16 %v91, %v91
    %v108 = vpack.c.bf16 %v92, %v92
    %v109 = vpack.c.bf16 %v93, %v93
    %v110 = vpack.c.bf16 %v94, %v94
    %v111 = vpack.c.bf16 %v95, %v95
    %v112 = vpack.c.bf16 %v96, %v96
    %v113 = vld [vmem:[#allocation6] sm:$0xff]
    %v114 = vld [vmem:[#allocation6 + $0x8] sm:$0xff]
    %v115 = vld [vmem:[#allocation6 + $0x10] sm:$0xff]
    %v116 = vld [vmem:[#allocation6 + $0x18] sm:$0xff]
    %v117 = vld [vmem:[#allocation6 + $0x20] sm:$0xff]
    %v118 = vld [vmem:[#allocation6 + $0x28] sm:$0xff]
    %v119 = vld [vmem:[#allocation6 + $0x30] sm:$0xff]
    %v120 = vld [vmem:[#allocation6 + $0x38] sm:$0xff]
    %v121 = vld [vmem:[#allocation6 + $0x40] sm:$0xff]
    %v122 = vld [vmem:[#allocation6 + $0x48] sm:$0xff]
    %v123 = vld [vmem:[#allocation6 + $0x50] sm:$0xff]
    %v124 = vld [vmem:[#allocation6 + $0x58] sm:$0xff]
    %v125 = vld [vmem:[#allocation6 + $0x60] sm:$0xff]
    %v126 = vld [vmem:[#allocation6 + $0x68] sm:$0xff]
    %v127 = vld [vmem:[#allocation6 + $0x70] sm:$0xff]
    %v128 = vld [vmem:[#allocation6 + $0x78] sm:$0xff]
    %v129 = vld [vmem:[#allocation6 + $0x80] sm:$0xff]
    %v130 = vld [vmem:[#allocation6 + $0x88] sm:$0xff]
    %v131 = vld [vmem:[#allocation6 + $0x90] sm:$0xff]
    %v132 = vld [vmem:[#allocation6 + $0x98] sm:$0xff]
    %v133 = vld [vmem:[#allocation6 + $0xa0] sm:$0xff]
    %v134 = vld [vmem:[#allocation6 + $0xa8] sm:$0xff]
    %v135 = vld [vmem:[#allocation6 + $0xb0] sm:$0xff]
    %v136 = vld [vmem:[#allocation6 + $0xb8] sm:$0xff]
    %v137 = vld [vmem:[#allocation6 + $0xc0] sm:$0xff]
    %v138 = vld [vmem:[#allocation6 + $0xc8] sm:$0xff]
    %v139 = vld [vmem:[#allocation6 + $0xd0] sm:$0xff]
    %v140 = vld [vmem:[#allocation6 + $0xd8] sm:$0xff]
    %v141 = vld [vmem:[#allocation6 + $0xe0] sm:$0xff]
    %v142 = vld [vmem:[#allocation6 + $0xe8] sm:$0xff]
    %v143 = vld [vmem:[#allocation6 + $0xf0] sm:$0xff]
    %v144 = vld [vmem:[#allocation6 + $0xf8] sm:$0xff]
    %v145 = vld [vmem:[#allocation6 + $0x100] sm:$0xff]
    %v146 = vld [vmem:[#allocation6 + $0x108] sm:$0xff]
    %v147 = vld [vmem:[#allocation6 + $0x110] sm:$0xff]
    %v148 = vld [vmem:[#allocation6 + $0x118] sm:$0xff]
    %v149 = vld [vmem:[#allocation6 + $0x120] sm:$0xff]
    %v150 = vld [vmem:[#allocation6 + $0x128] sm:$0xff]
    %v151 = vld [vmem:[#allocation6 + $0x130] sm:$0xff]
    %v152 = vld [vmem:[#allocation6 + $0x138] sm:$0xff]
    %v153 = vld [vmem:[#allocation6 + $0x140] sm:$0xff]
    %v154 = vld [vmem:[#allocation6 + $0x148] sm:$0xff]
    %v155 = vld [vmem:[#allocation6 + $0x150] sm:$0xff]
    %v156 = vld [vmem:[#allocation6 + $0x158] sm:$0xff]
    %v157 = vld [vmem:[#allocation6 + $0x160] sm:$0xff]
    %v158 = vld [vmem:[#allocation6 + $0x168] sm:$0xff]
    %v159 = vld [vmem:[#allocation6 + $0x170] sm:$0xff]
    %v160 = vld [vmem:[#allocation6 + $0x178] sm:$0xff]
    %v161 = vld [vmem:[#allocation6 + $0x180] sm:$0xff]
    %v162 = vld [vmem:[#allocation6 + $0x188] sm:$0xff]
    %v163 = vld [vmem:[#allocation6 + $0x190] sm:$0xff]
    %v164 = vld [vmem:[#allocation6 + $0x198] sm:$0xff]
    %v165 = vld [vmem:[#allocation6 + $0x1a0] sm:$0xff]
    %v166 = vld [vmem:[#allocation6 + $0x1a8] sm:$0xff]
    %v167 = vld [vmem:[#allocation6 + $0x1b0] sm:$0xff]
    %v168 = vld [vmem:[#allocation6 + $0x1b8] sm:$0xff]
    %v169 = vld [vmem:[#allocation6 + $0x1c0] sm:$0xff]
    %v170 = vld [vmem:[#allocation6 + $0x1c8] sm:$0xff]
    %v171 = vld [vmem:[#allocation6 + $0x1d0] sm:$0xff]
    %v172 = vld [vmem:[#allocation6 + $0x1d8] sm:$0xff]
    %v173 = vld [vmem:[#allocation6 + $0x1e0] sm:$0xff]
    %v174 = vld [vmem:[#allocation6 + $0x1e8] sm:$0xff]
    %v175 = vld [vmem:[#allocation6 + $0x1f0] sm:$0xff]
    %v176 = vld [vmem:[#allocation6 + $0x1f8] sm:$0xff]
    %v177 = vld [vmem:[#allocation6 + $0x200] sm:$0xff]
    %v178 = vld [vmem:[#allocation6 + $0x208] sm:$0xff]
    %v179 = vld [vmem:[#allocation6 + $0x210] sm:$0xff]
    %v180 = vld [vmem:[#allocation6 + $0x218] sm:$0xff]
    %v181 = vld [vmem:[#allocation6 + $0x220] sm:$0xff]
    %v182 = vld [vmem:[#allocation6 + $0x228] sm:$0xff]
    %v183 = vld [vmem:[#allocation6 + $0x230] sm:$0xff]
    %v184 = vld [vmem:[#allocation6 + $0x238] sm:$0xff]
    %v185 = vld [vmem:[#allocation6 + $0x240] sm:$0xff]
    %v186 = vld [vmem:[#allocation6 + $0x248] sm:$0xff]
    %v187 = vld [vmem:[#allocation6 + $0x250] sm:$0xff]
    %v188 = vld [vmem:[#allocation6 + $0x258] sm:$0xff]
    %v189 = vld [vmem:[#allocation6 + $0x260] sm:$0xff]
    %v190 = vld [vmem:[#allocation6 + $0x268] sm:$0xff]
    %v191 = vld [vmem:[#allocation6 + $0x270] sm:$0xff]
    %v192 = vld [vmem:[#allocation6 + $0x278] sm:$0xff]
    %v193 = vld [vmem:[#allocation6 + $0x280] sm:$0xff]
    %v194 = vld [vmem:[#allocation6 + $0x288] sm:$0xff]
    %v195 = vld [vmem:[#allocation6 + $0x290] sm:$0xff]
    %v196 = vld [vmem:[#allocation6 + $0x298] sm:$0xff]
    %v197 = vld [vmem:[#allocation6 + $0x2a0] sm:$0xff]
    %v198 = vld [vmem:[#allocation6 + $0x2a8] sm:$0xff]
    %v199 = vld [vmem:[#allocation6 + $0x2b0] sm:$0xff]
    %v200 = vld [vmem:[#allocation6 + $0x2b8] sm:$0xff]
    %v201 = vld [vmem:[#allocation6 + $0x2c0] sm:$0xff]
    %v202 = vld [vmem:[#allocation6 + $0x2c8] sm:$0xff]
    %v203 = vld [vmem:[#allocation6 + $0x2d0] sm:$0xff]
    %v204 = vld [vmem:[#allocation6 + $0x2d8] sm:$0xff]
    %v205 = vld [vmem:[#allocation6 + $0x2e0] sm:$0xff]
    %v206 = vld [vmem:[#allocation6 + $0x2e8] sm:$0xff]
    %v207 = vld [vmem:[#allocation6 + $0x2f0] sm:$0xff]
    %v208 = vld [vmem:[#allocation6 + $0x2f8] sm:$0xff]
    %v209 = vld [vmem:[#allocation6 + $0x300] sm:$0xff]
    %v210 = vld [vmem:[#allocation6 + $0x308] sm:$0xff]
    %v211 = vld [vmem:[#allocation6 + $0x310] sm:$0xff]
    %v212 = vld [vmem:[#allocation6 + $0x318] sm:$0xff]
    %v213 = vld [vmem:[#allocation6 + $0x320] sm:$0xff]
    %v214 = vld [vmem:[#allocation6 + $0x328] sm:$0xff]
    %v215 = vld [vmem:[#allocation6 + $0x330] sm:$0xff]
    %v216 = vld [vmem:[#allocation6 + $0x338] sm:$0xff]
    %v217 = vld [vmem:[#allocation6 + $0x340] sm:$0xff]
    %v218 = vld [vmem:[#allocation6 + $0x348] sm:$0xff]
    %v219 = vld [vmem:[#allocation6 + $0x350] sm:$0xff]
    %v220 = vld [vmem:[#allocation6 + $0x358] sm:$0xff]
    %v221 = vld [vmem:[#allocation6 + $0x360] sm:$0xff]
    %v222 = vld [vmem:[#allocation6 + $0x368] sm:$0xff]
    %v223 = vld [vmem:[#allocation6 + $0x370] sm:$0xff]
    %v224 = vld [vmem:[#allocation6 + $0x378] sm:$0xff]
    %v225 = vld [vmem:[#allocation6 + $0x380] sm:$0xff]
    %v226 = vld [vmem:[#allocation6 + $0x388] sm:$0xff]
    %v227 = vld [vmem:[#allocation6 + $0x390] sm:$0xff]
    %v228 = vld [vmem:[#allocation6 + $0x398] sm:$0xff]
    %v229 = vld [vmem:[#allocation6 + $0x3a0] sm:$0xff]
    %v230 = vld [vmem:[#allocation6 + $0x3a8] sm:$0xff]
    %v231 = vld [vmem:[#allocation6 + $0x3b0] sm:$0xff]
    %v232 = vld [vmem:[#allocation6 + $0x3b8] sm:$0xff]
    %v233 = vld [vmem:[#allocation6 + $0x3c0] sm:$0xff]
    %v234 = vld [vmem:[#allocation6 + $0x3c8] sm:$0xff]
    %v235 = vld [vmem:[#allocation6 + $0x3d0] sm:$0xff]
    %v236 = vld [vmem:[#allocation6 + $0x3d8] sm:$0xff]
    %v237 = vld [vmem:[#allocation6 + $0x3e0] sm:$0xff]
    %v238 = vld [vmem:[#allocation6 + $0x3e8] sm:$0xff]
    %v239 = vld [vmem:[#allocation6 + $0x3f0] sm:$0xff]
    %v240 = vld [vmem:[#allocation6 + $0x3f8] sm:$0xff]
    %v241 = vld [vmem:[#allocation6 + $0x400] sm:$0xff]
    %v242 = vld [vmem:[#allocation6 + $0x408] sm:$0xff]
    %v243 = vld [vmem:[#allocation6 + $0x410] sm:$0xff]
    %v244 = vld [vmem:[#allocation6 + $0x418] sm:$0xff]
    %v245 = vld [vmem:[#allocation6 + $0x420] sm:$0xff]
    %v246 = vld [vmem:[#allocation6 + $0x428] sm:$0xff]
    %v247 = vld [vmem:[#allocation6 + $0x430] sm:$0xff]
    %v248 = vld [vmem:[#allocation6 + $0x438] sm:$0xff]
    %v249 = vld [vmem:[#allocation6 + $0x440] sm:$0xff]
    %v250 = vld [vmem:[#allocation6 + $0x448] sm:$0xff]
    %v251 = vld [vmem:[#allocation6 + $0x450] sm:$0xff]
    %v252 = vld [vmem:[#allocation6 + $0x458] sm:$0xff]
    %v253 = vld [vmem:[#allocation6 + $0x460] sm:$0xff]
    %v254 = vld [vmem:[#allocation6 + $0x468] sm:$0xff]
    %v255 = vld [vmem:[#allocation6 + $0x470] sm:$0xff]
    %v256 = vld [vmem:[#allocation6 + $0x478] sm:$0xff]
    %v257 = vld [vmem:[#allocation6 + $0x480] sm:$0xff]
    %v258 = vld [vmem:[#allocation6 + $0x488] sm:$0xff]
    %v259 = vld [vmem:[#allocation6 + $0x490] sm:$0xff]
    %v260 = vld [vmem:[#allocation6 + $0x498] sm:$0xff]
    %v261 = vld [vmem:[#allocation6 + $0x4a0] sm:$0xff]
    %v262 = vld [vmem:[#allocation6 + $0x4a8] sm:$0xff]
    %v263 = vld [vmem:[#allocation6 + $0x4b0] sm:$0xff]
    %v264 = vld [vmem:[#allocation6 + $0x4b8] sm:$0xff]
    %v265 = vld [vmem:[#allocation6 + $0x4c0] sm:$0xff]
    %v266 = vld [vmem:[#allocation6 + $0x4c8] sm:$0xff]
    %v267 = vld [vmem:[#allocation6 + $0x4d0] sm:$0xff]
    %v268 = vld [vmem:[#allocation6 + $0x4d8] sm:$0xff]
    %v269 = vld [vmem:[#allocation6 + $0x4e0] sm:$0xff]
    %v270 = vld [vmem:[#allocation6 + $0x4e8] sm:$0xff]
    %v271 = vld [vmem:[#allocation6 + $0x4f0] sm:$0xff]
    %v272 = vld [vmem:[#allocation6 + $0x4f8] sm:$0xff]
    %v273 = vld [vmem:[#allocation6 + $0x500] sm:$0xff]
    %v274 = vld [vmem:[#allocation6 + $0x508] sm:$0xff]
    %v275 = vld [vmem:[#allocation6 + $0x510] sm:$0xff]
    %v276 = vld [vmem:[#allocation6 + $0x518] sm:$0xff]
    %v277 = vld [vmem:[#allocation6 + $0x520] sm:$0xff]
    %v278 = vld [vmem:[#allocation6 + $0x528] sm:$0xff]
    %v279 = vld [vmem:[#allocation6 + $0x530] sm:$0xff]
    %v280 = vld [vmem:[#allocation6 + $0x538] sm:$0xff]
    %v281 = vld [vmem:[#allocation6 + $0x540] sm:$0xff]
    %v282 = vld [vmem:[#allocation6 + $0x548] sm:$0xff]
    %v283 = vld [vmem:[#allocation6 + $0x550] sm:$0xff]
    %v284 = vld [vmem:[#allocation6 + $0x558] sm:$0xff]
    %v285 = vld [vmem:[#allocation6 + $0x560] sm:$0xff]
    %v286 = vld [vmem:[#allocation6 + $0x568] sm:$0xff]
    %v287 = vld [vmem:[#allocation6 + $0x570] sm:$0xff]
    %v288 = vld [vmem:[#allocation6 + $0x578] sm:$0xff]
    %v289 = vld [vmem:[#allocation6 + $0x580] sm:$0xff]
    %v290 = vld [vmem:[#allocation6 + $0x588] sm:$0xff]
    %v291 = vld [vmem:[#allocation6 + $0x590] sm:$0xff]
    %v292 = vld [vmem:[#allocation6 + $0x598] sm:$0xff]
    %v293 = vld [vmem:[#allocation6 + $0x5a0] sm:$0xff]
    %v294 = vld [vmem:[#allocation6 + $0x5a8] sm:$0xff]
    %v295 = vld [vmem:[#allocation6 + $0x5b0] sm:$0xff]
    %v296 = vld [vmem:[#allocation6 + $0x5b8] sm:$0xff]
    %v297 = vld [vmem:[#allocation6 + $0x5c0] sm:$0xff]
    %v298 = vld [vmem:[#allocation6 + $0x5c8] sm:$0xff]
    %v299 = vld [vmem:[#allocation6 + $0x5d0] sm:$0xff]
    %v300 = vld [vmem:[#allocation6 + $0x5d8] sm:$0xff]
    %v301 = vld [vmem:[#allocation6 + $0x5e0] sm:$0xff]
    %v302 = vld [vmem:[#allocation6 + $0x5e8] sm:$0xff]
    %v303 = vld [vmem:[#allocation6 + $0x5f0] sm:$0xff]
    %v304 = vld [vmem:[#allocation6 + $0x5f8] sm:$0xff]
    %v305 = vld [vmem:[#allocation6 + $0x600] sm:$0xff]
    %v306 = vld [vmem:[#allocation6 + $0x608] sm:$0xff]
    %v307 = vld [vmem:[#allocation6 + $0x610] sm:$0xff]
    %v308 = vld [vmem:[#allocation6 + $0x618] sm:$0xff]
    %v309 = vld [vmem:[#allocation6 + $0x620] sm:$0xff]
    %v310 = vld [vmem:[#allocation6 + $0x628] sm:$0xff]
    %v311 = vld [vmem:[#allocation6 + $0x630] sm:$0xff]
    %v312 = vld [vmem:[#allocation6 + $0x638] sm:$0xff]
    %v313 = vld [vmem:[#allocation6 + $0x640] sm:$0xff]
    %v314 = vld [vmem:[#allocation6 + $0x648] sm:$0xff]
    %v315 = vld [vmem:[#allocation6 + $0x650] sm:$0xff]
    %v316 = vld [vmem:[#allocation6 + $0x658] sm:$0xff]
    %v317 = vld [vmem:[#allocation6 + $0x660] sm:$0xff]
    %v318 = vld [vmem:[#allocation6 + $0x668] sm:$0xff]
    %v319 = vld [vmem:[#allocation6 + $0x670] sm:$0xff]
    %v320 = vld [vmem:[#allocation6 + $0x678] sm:$0xff]
    %v321 = vld [vmem:[#allocation6 + $0x680] sm:$0xff]
    %v322 = vld [vmem:[#allocation6 + $0x688] sm:$0xff]
    %v323 = vld [vmem:[#allocation6 + $0x690] sm:$0xff]
    %v324 = vld [vmem:[#allocation6 + $0x698] sm:$0xff]
    %v325 = vld [vmem:[#allocation6 + $0x6a0] sm:$0xff]
    %v326 = vld [vmem:[#allocation6 + $0x6a8] sm:$0xff]
    %v327 = vld [vmem:[#allocation6 + $0x6b0] sm:$0xff]
    %v328 = vld [vmem:[#allocation6 + $0x6b8] sm:$0xff]
    %v329 = vld [vmem:[#allocation6 + $0x6c0] sm:$0xff]
    %v330 = vld [vmem:[#allocation6 + $0x6c8] sm:$0xff]
    %v331 = vld [vmem:[#allocation6 + $0x6d0] sm:$0xff]
    %v332 = vld [vmem:[#allocation6 + $0x6d8] sm:$0xff]
    %v333 = vld [vmem:[#allocation6 + $0x6e0] sm:$0xff]
    %v334 = vld [vmem:[#allocation6 + $0x6e8] sm:$0xff]
    %v335 = vld [vmem:[#allocation6 + $0x6f0] sm:$0xff]
    %v336 = vld [vmem:[#allocation6 + $0x6f8] sm:$0xff]
    %v337 = vld [vmem:[#allocation6 + $0x700] sm:$0xff]
    %v338 = vld [vmem:[#allocation6 + $0x708] sm:$0xff]
    %v339 = vld [vmem:[#allocation6 + $0x710] sm:$0xff]
    %v340 = vld [vmem:[#allocation6 + $0x718] sm:$0xff]
    %v341 = vld [vmem:[#allocation6 + $0x720] sm:$0xff]
    %v342 = vld [vmem:[#allocation6 + $0x728] sm:$0xff]
    %v343 = vld [vmem:[#allocation6 + $0x730] sm:$0xff]
    %v344 = vld [vmem:[#allocation6 + $0x738] sm:$0xff]
    %v345 = vld [vmem:[#allocation6 + $0x740] sm:$0xff]
    %v346 = vld [vmem:[#allocation6 + $0x748] sm:$0xff]
    %v347 = vld [vmem:[#allocation6 + $0x750] sm:$0xff]
    %v348 = vld [vmem:[#allocation6 + $0x758] sm:$0xff]
    %v349 = vld [vmem:[#allocation6 + $0x760] sm:$0xff]
    %v350 = vld [vmem:[#allocation6 + $0x768] sm:$0xff]
    %v351 = vld [vmem:[#allocation6 + $0x770] sm:$0xff]
    %v352 = vld [vmem:[#allocation6 + $0x778] sm:$0xff]
    %v353 = vld [vmem:[#allocation6 + $0x780] sm:$0xff]
    %v354 = vld [vmem:[#allocation6 + $0x788] sm:$0xff]
    %v355 = vld [vmem:[#allocation6 + $0x790] sm:$0xff]
    %v356 = vld [vmem:[#allocation6 + $0x798] sm:$0xff]
    %v357 = vld [vmem:[#allocation6 + $0x7a0] sm:$0xff]
    %v358 = vld [vmem:[#allocation6 + $0x7a8] sm:$0xff]
    %v359 = vld [vmem:[#allocation6 + $0x7b0] sm:$0xff]
    %v360 = vld [vmem:[#allocation6 + $0x7b8] sm:$0xff]
    %v361 = vld [vmem:[#allocation6 + $0x7c0] sm:$0xff]
    %v362 = vld [vmem:[#allocation6 + $0x7c8] sm:$0xff]
    %v363 = vld [vmem:[#allocation6 + $0x7d0] sm:$0xff]
    %v364 = vld [vmem:[#allocation6 + $0x7d8] sm:$0xff]
    %v365 = vld [vmem:[#allocation6 + $0x7e0] sm:$0xff]
    %v366 = vld [vmem:[#allocation6 + $0x7e8] sm:$0xff]
    %v367 = vld [vmem:[#allocation6 + $0x7f0] sm:$0xff]
    %v368 = vld [vmem:[#allocation6 + $0x7f8] sm:$0xff]
    %v369 = vld [vmem:[%s2] sm:$0x3]
    %v371 = vlaneseq
    %v372 = vshrl.u32 %v371, 7
    %v373 = vsub.s32 0, %v372
    %v374 = vrot.slane %v369, %v373
    %v375 = vlaneseq
    %v376 = vshrl.u32 %v375, 7
    %v377 = vsub.s32 1, %v376
    %v378 = vrot.slane %v369, %v377
    %v637 = vunpack.c.l.b16 %v113
    %v638 = vunpack.c.h.b16 %v113
    %v639 = vunpack.c.l.b16 %v114
    %v640 = vunpack.c.h.b16 %v114
    %v641 = vunpack.c.l.b16 %v115
    %v642 = vunpack.c.h.b16 %v115
    %v643 = vunpack.c.l.b16 %v116
    %v644 = vunpack.c.h.b16 %v116
    %v645 = vunpack.c.l.b16 %v117
    %v646 = vunpack.c.h.b16 %v117
    %v647 = vunpack.c.l.b16 %v118
    %v648 = vunpack.c.h.b16 %v118
    %v649 = vunpack.c.l.b16 %v119
    %v650 = vunpack.c.h.b16 %v119
    %v651 = vunpack.c.l.b16 %v120
    %v652 = vunpack.c.h.b16 %v120
    %v653 = vunpack.c.l.b16 %v121
    %v654 = vunpack.c.h.b16 %v121
    %v655 = vunpack.c.l.b16 %v122
    %v656 = vunpack.c.h.b16 %v122
    %v657 = vunpack.c.l.b16 %v123
    %v658 = vunpack.c.h.b16 %v123
    %v659 = vunpack.c.l.b16 %v124
    %v660 = vunpack.c.h.b16 %v124
    %v661 = vunpack.c.l.b16 %v125
    %v662 = vunpack.c.h.b16 %v125
    %v663 = vunpack.c.l.b16 %v126
    %v664 = vunpack.c.h.b16 %v126
    %v665 = vunpack.c.l.b16 %v127
    %v666 = vunpack.c.h.b16 %v127
    %v667 = vunpack.c.l.b16 %v128
    %v668 = vunpack.c.h.b16 %v128
    %v669 = vunpack.c.l.b16 %v129
    %v670 = vunpack.c.h.b16 %v129
    %v671 = vunpack.c.l.b16 %v130
    %v672 = vunpack.c.h.b16 %v130
    %v673 = vunpack.c.l.b16 %v131
    %v674 = vunpack.c.h.b16 %v131
    %v675 = vunpack.c.l.b16 %v132
    %v676 = vunpack.c.h.b16 %v132
    %v677 = vunpack.c.l.b16 %v133
    %v678 = vunpack.c.h.b16 %v133
    %v679 = vunpack.c.l.b16 %v134
    %v680 = vunpack.c.h.b16 %v134
    %v681 = vunpack.c.l.b16 %v135
    %v682 = vunpack.c.h.b16 %v135
    %v683 = vunpack.c.l.b16 %v136
    %v684 = vunpack.c.h.b16 %v136
    %v685 = vunpack.c.l.b16 %v137
    %v686 = vunpack.c.h.b16 %v137
    %v687 = vunpack.c.l.b16 %v138
    %v688 = vunpack.c.h.b16 %v138
    %v689 = vunpack.c.l.b16 %v139
    %v690 = vunpack.c.h.b16 %v139
    %v691 = vunpack.c.l.b16 %v140
    %v692 = vunpack.c.h.b16 %v140
    %v693 = vunpack.c.l.b16 %v141
    %v694 = vunpack.c.h.b16 %v141
    %v695 = vunpack.c.l.b16 %v142
    %v696 = vunpack.c.h.b16 %v142
    %v697 = vunpack.c.l.b16 %v143
    %v698 = vunpack.c.h.b16 %v143
    %v699 = vunpack.c.l.b16 %v144
    %v700 = vunpack.c.h.b16 %v144
    %v701 = vunpack.c.l.b16 %v145
    %v702 = vunpack.c.h.b16 %v145
    %v703 = vunpack.c.l.b16 %v146
    %v704 = vunpack.c.h.b16 %v146
    %v705 = vunpack.c.l.b16 %v147
    %v706 = vunpack.c.h.b16 %v147
    %v707 = vunpack.c.l.b16 %v148
    %v708 = vunpack.c.h.b16 %v148
    %v709 = vunpack.c.l.b16 %v149
    %v710 = vunpack.c.h.b16 %v149
    %v711 = vunpack.c.l.b16 %v150
    %v712 = vunpack.c.h.b16 %v150
    %v713 = vunpack.c.l.b16 %v151
    %v714 = vunpack.c.h.b16 %v151
    %v715 = vunpack.c.l.b16 %v152
    %v716 = vunpack.c.h.b16 %v152
    %v717 = vunpack.c.l.b16 %v153
    %v718 = vunpack.c.h.b16 %v153
    %v719 = vunpack.c.l.b16 %v154
    %v720 = vunpack.c.h.b16 %v154
    %v721 = vunpack.c.l.b16 %v155
    %v722 = vunpack.c.h.b16 %v155
    %v723 = vunpack.c.l.b16 %v156
    %v724 = vunpack.c.h.b16 %v156
    %v725 = vunpack.c.l.b16 %v157
    %v726 = vunpack.c.h.b16 %v157
    %v727 = vunpack.c.l.b16 %v158
    %v728 = vunpack.c.h.b16 %v158
    %v729 = vunpack.c.l.b16 %v159
    %v730 = vunpack.c.h.b16 %v159
    %v731 = vunpack.c.l.b16 %v160
    %v732 = vunpack.c.h.b16 %v160
    %v733 = vunpack.c.l.b16 %v161
    %v734 = vunpack.c.h.b16 %v161
    %v735 = vunpack.c.l.b16 %v162
    %v736 = vunpack.c.h.b16 %v162
    %v737 = vunpack.c.l.b16 %v163
    %v738 = vunpack.c.h.b16 %v163
    %v739 = vunpack.c.l.b16 %v164
    %v740 = vunpack.c.h.b16 %v164
    %v741 = vunpack.c.l.b16 %v165
    %v742 = vunpack.c.h.b16 %v165
    %v743 = vunpack.c.l.b16 %v166
    %v744 = vunpack.c.h.b16 %v166
    %v745 = vunpack.c.l.b16 %v167
    %v746 = vunpack.c.h.b16 %v167
    %v747 = vunpack.c.l.b16 %v168
    %v748 = vunpack.c.h.b16 %v168
    %v749 = vunpack.c.l.b16 %v169
    %v750 = vunpack.c.h.b16 %v169
    %v751 = vunpack.c.l.b16 %v170
    %v752 = vunpack.c.h.b16 %v170
    %v753 = vunpack.c.l.b16 %v171
    %v754 = vunpack.c.h.b16 %v171
    %v755 = vunpack.c.l.b16 %v172
    %v756 = vunpack.c.h.b16 %v172
    %v757 = vunpack.c.l.b16 %v173
    %v758 = vunpack.c.h.b16 %v173
    %v759 = vunpack.c.l.b16 %v174
    %v760 = vunpack.c.h.b16 %v174
    %v761 = vunpack.c.l.b16 %v175
    %v762 = vunpack.c.h.b16 %v175
    %v763 = vunpack.c.l.b16 %v176
    %v764 = vunpack.c.h.b16 %v176
    %v765 = vunpack.c.l.b16 %v177
    %v766 = vunpack.c.h.b16 %v177
    %v767 = vunpack.c.l.b16 %v178
    %v768 = vunpack.c.h.b16 %v178
    %v769 = vunpack.c.l.b16 %v179
    %v770 = vunpack.c.h.b16 %v179
    %v771 = vunpack.c.l.b16 %v180
    %v772 = vunpack.c.h.b16 %v180
    %v773 = vunpack.c.l.b16 %v181
    %v774 = vunpack.c.h.b16 %v181
    %v775 = vunpack.c.l.b16 %v182
    %v776 = vunpack.c.h.b16 %v182
    %v777 = vunpack.c.l.b16 %v183
    %v778 = vunpack.c.h.b16 %v183
    %v779 = vunpack.c.l.b16 %v184
    %v780 = vunpack.c.h.b16 %v184
    %v781 = vunpack.c.l.b16 %v185
    %v782 = vunpack.c.h.b16 %v185
    %v783 = vunpack.c.l.b16 %v186
    %v784 = vunpack.c.h.b16 %v186
    %v785 = vunpack.c.l.b16 %v187
    %v786 = vunpack.c.h.b16 %v187
    %v787 = vunpack.c.l.b16 %v188
    %v788 = vunpack.c.h.b16 %v188
    %v789 = vunpack.c.l.b16 %v189
    %v790 = vunpack.c.h.b16 %v189
    %v791 = vunpack.c.l.b16 %v190
    %v792 = vunpack.c.h.b16 %v190
    %v793 = vunpack.c.l.b16 %v191
    %v794 = vunpack.c.h.b16 %v191
    %v795 = vunpack.c.l.b16 %v192
    %v796 = vunpack.c.h.b16 %v192
    %v797 = vunpack.c.l.b16 %v193
    %v798 = vunpack.c.h.b16 %v193
    %v799 = vunpack.c.l.b16 %v194
    %v800 = vunpack.c.h.b16 %v194
    %v801 = vunpack.c.l.b16 %v195
    %v802 = vunpack.c.h.b16 %v195
    %v803 = vunpack.c.l.b16 %v196
    %v804 = vunpack.c.h.b16 %v196
    %v805 = vunpack.c.l.b16 %v197
    %v806 = vunpack.c.h.b16 %v197
    %v807 = vunpack.c.l.b16 %v198
    %v808 = vunpack.c.h.b16 %v198
    %v809 = vunpack.c.l.b16 %v199
    %v810 = vunpack.c.h.b16 %v199
    %v811 = vunpack.c.l.b16 %v200
    %v812 = vunpack.c.h.b16 %v200
    %v813 = vunpack.c.l.b16 %v201
    %v814 = vunpack.c.h.b16 %v201
    %v815 = vunpack.c.l.b16 %v202
    %v816 = vunpack.c.h.b16 %v202
    %v817 = vunpack.c.l.b16 %v203
    %v818 = vunpack.c.h.b16 %v203
    %v819 = vunpack.c.l.b16 %v204
    %v820 = vunpack.c.h.b16 %v204
    %v821 = vunpack.c.l.b16 %v205
    %v822 = vunpack.c.h.b16 %v205
    %v823 = vunpack.c.l.b16 %v206
    %v824 = vunpack.c.h.b16 %v206
    %v825 = vunpack.c.l.b16 %v207
    %v826 = vunpack.c.h.b16 %v207
    %v827 = vunpack.c.l.b16 %v208
    %v828 = vunpack.c.h.b16 %v208
    %v829 = vunpack.c.l.b16 %v209
    %v830 = vunpack.c.h.b16 %v209
    %v831 = vunpack.c.l.b16 %v210
    %v832 = vunpack.c.h.b16 %v210
    %v833 = vunpack.c.l.b16 %v211
    %v834 = vunpack.c.h.b16 %v211
    %v835 = vunpack.c.l.b16 %v212
    %v836 = vunpack.c.h.b16 %v212
    %v837 = vunpack.c.l.b16 %v213
    %v838 = vunpack.c.h.b16 %v213
    %v839 = vunpack.c.l.b16 %v214
    %v840 = vunpack.c.h.b16 %v214
    %v841 = vunpack.c.l.b16 %v215
    %v842 = vunpack.c.h.b16 %v215
    %v843 = vunpack.c.l.b16 %v216
    %v844 = vunpack.c.h.b16 %v216
    %v845 = vunpack.c.l.b16 %v217
    %v846 = vunpack.c.h.b16 %v217
    %v847 = vunpack.c.l.b16 %v218
    %v848 = vunpack.c.h.b16 %v218
    %v849 = vunpack.c.l.b16 %v219
    %v850 = vunpack.c.h.b16 %v219
    %v851 = vunpack.c.l.b16 %v220
    %v852 = vunpack.c.h.b16 %v220
    %v853 = vunpack.c.l.b16 %v221
    %v854 = vunpack.c.h.b16 %v221
    %v855 = vunpack.c.l.b16 %v222
    %v856 = vunpack.c.h.b16 %v222
    %v857 = vunpack.c.l.b16 %v223
    %v858 = vunpack.c.h.b16 %v223
    %v859 = vunpack.c.l.b16 %v224
    %v860 = vunpack.c.h.b16 %v224
    %v861 = vunpack.c.l.b16 %v225
    %v862 = vunpack.c.h.b16 %v225
    %v863 = vunpack.c.l.b16 %v226
    %v864 = vunpack.c.h.b16 %v226
    %v865 = vunpack.c.l.b16 %v227
    %v866 = vunpack.c.h.b16 %v227
    %v867 = vunpack.c.l.b16 %v228
    %v868 = vunpack.c.h.b16 %v228
    %v869 = vunpack.c.l.b16 %v229
    %v870 = vunpack.c.h.b16 %v229
    %v871 = vunpack.c.l.b16 %v230
    %v872 = vunpack.c.h.b16 %v230
    %v873 = vunpack.c.l.b16 %v231
    %v874 = vunpack.c.h.b16 %v231
    %v875 = vunpack.c.l.b16 %v232
    %v876 = vunpack.c.h.b16 %v232
    %v877 = vunpack.c.l.b16 %v233
    %v878 = vunpack.c.h.b16 %v233
    %v879 = vunpack.c.l.b16 %v234
    %v880 = vunpack.c.h.b16 %v234
    %v881 = vunpack.c.l.b16 %v235
    %v882 = vunpack.c.h.b16 %v235
    %v883 = vunpack.c.l.b16 %v236
    %v884 = vunpack.c.h.b16 %v236
    %v885 = vunpack.c.l.b16 %v237
    %v886 = vunpack.c.h.b16 %v237
    %v887 = vunpack.c.l.b16 %v238
    %v888 = vunpack.c.h.b16 %v238
    %v889 = vunpack.c.l.b16 %v239
    %v890 = vunpack.c.h.b16 %v239
    %v891 = vunpack.c.l.b16 %v240
    %v892 = vunpack.c.h.b16 %v240
    %v893 = vunpack.c.l.b16 %v241
    %v894 = vunpack.c.h.b16 %v241
    %v895 = vunpack.c.l.b16 %v242
    %v896 = vunpack.c.h.b16 %v242
    %v897 = vunpack.c.l.b16 %v243
    %v898 = vunpack.c.h.b16 %v243
    %v899 = vunpack.c.l.b16 %v244
    %v900 = vunpack.c.h.b16 %v244
    %v901 = vunpack.c.l.b16 %v245
    %v902 = vunpack.c.h.b16 %v245
    %v903 = vunpack.c.l.b16 %v246
    %v904 = vunpack.c.h.b16 %v246
    %v905 = vunpack.c.l.b16 %v247
    %v906 = vunpack.c.h.b16 %v247
    %v907 = vunpack.c.l.b16 %v248
    %v908 = vunpack.c.h.b16 %v248
    %v909 = vunpack.c.l.b16 %v249
    %v910 = vunpack.c.h.b16 %v249
    %v911 = vunpack.c.l.b16 %v250
    %v912 = vunpack.c.h.b16 %v250
    %v913 = vunpack.c.l.b16 %v251
    %v914 = vunpack.c.h.b16 %v251
    %v915 = vunpack.c.l.b16 %v252
    %v916 = vunpack.c.h.b16 %v252
    %v917 = vunpack.c.l.b16 %v253
    %v918 = vunpack.c.h.b16 %v253
    %v919 = vunpack.c.l.b16 %v254
    %v920 = vunpack.c.h.b16 %v254
    %v921 = vunpack.c.l.b16 %v255
    %v922 = vunpack.c.h.b16 %v255
    %v923 = vunpack.c.l.b16 %v256
    %v924 = vunpack.c.h.b16 %v256
    %v925 = vunpack.c.l.b16 %v257
    %v926 = vunpack.c.h.b16 %v257
    %v927 = vunpack.c.l.b16 %v258
    %v928 = vunpack.c.h.b16 %v258
    %v929 = vunpack.c.l.b16 %v259
    %v930 = vunpack.c.h.b16 %v259
    %v931 = vunpack.c.l.b16 %v260
    %v932 = vunpack.c.h.b16 %v260
    %v933 = vunpack.c.l.b16 %v261
    %v934 = vunpack.c.h.b16 %v261
    %v935 = vunpack.c.l.b16 %v262
    %v936 = vunpack.c.h.b16 %v262
    %v937 = vunpack.c.l.b16 %v263
    %v938 = vunpack.c.h.b16 %v263
    %v939 = vunpack.c.l.b16 %v264
    %v940 = vunpack.c.h.b16 %v264
    %v941 = vunpack.c.l.b16 %v265
    %v942 = vunpack.c.h.b16 %v265
    %v943 = vunpack.c.l.b16 %v266
    %v944 = vunpack.c.h.b16 %v266
    %v945 = vunpack.c.l.b16 %v267
    %v946 = vunpack.c.h.b16 %v267
    %v947 = vunpack.c.l.b16 %v268
    %v948 = vunpack.c.h.b16 %v268
    %v949 = vunpack.c.l.b16 %v269
    %v950 = vunpack.c.h.b16 %v269
    %v951 = vunpack.c.l.b16 %v270
    %v952 = vunpack.c.h.b16 %v270
    %v953 = vunpack.c.l.b16 %v271
    %v954 = vunpack.c.h.b16 %v271
    %v955 = vunpack.c.l.b16 %v272
    %v956 = vunpack.c.h.b16 %v272
    %v957 = vunpack.c.l.b16 %v273
    %v958 = vunpack.c.h.b16 %v273
    %v959 = vunpack.c.l.b16 %v274
    %v960 = vunpack.c.h.b16 %v274
    %v961 = vunpack.c.l.b16 %v275
    %v962 = vunpack.c.h.b16 %v275
    %v963 = vunpack.c.l.b16 %v276
    %v964 = vunpack.c.h.b16 %v276
    %v965 = vunpack.c.l.b16 %v277
    %v966 = vunpack.c.h.b16 %v277
    %v967 = vunpack.c.l.b16 %v278
    %v968 = vunpack.c.h.b16 %v278
    %v969 = vunpack.c.l.b16 %v279
    %v970 = vunpack.c.h.b16 %v279
    %v971 = vunpack.c.l.b16 %v280
    %v972 = vunpack.c.h.b16 %v280
    %v973 = vunpack.c.l.b16 %v281
    %v974 = vunpack.c.h.b16 %v281
    %v975 = vunpack.c.l.b16 %v282
    %v976 = vunpack.c.h.b16 %v282
    %v977 = vunpack.c.l.b16 %v283
    %v978 = vunpack.c.h.b16 %v283
    %v979 = vunpack.c.l.b16 %v284
    %v980 = vunpack.c.h.b16 %v284
    %v981 = vunpack.c.l.b16 %v285
    %v982 = vunpack.c.h.b16 %v285
    %v983 = vunpack.c.l.b16 %v286
    %v984 = vunpack.c.h.b16 %v286
    %v985 = vunpack.c.l.b16 %v287
    %v986 = vunpack.c.h.b16 %v287
    %v987 = vunpack.c.l.b16 %v288
    %v988 = vunpack.c.h.b16 %v288
    %v989 = vunpack.c.l.b16 %v289
    %v990 = vunpack.c.h.b16 %v289
    %v991 = vunpack.c.l.b16 %v290
    %v992 = vunpack.c.h.b16 %v290
    %v993 = vunpack.c.l.b16 %v291
    %v994 = vunpack.c.h.b16 %v291
    %v995 = vunpack.c.l.b16 %v292
    %v996 = vunpack.c.h.b16 %v292
    %v997 = vunpack.c.l.b16 %v293
    %v998 = vunpack.c.h.b16 %v293
    %v999 = vunpack.c.l.b16 %v294
    %v1000 = vunpack.c.h.b16 %v294
    %v1001 = vunpack.c.l.b16 %v295
    %v1002 = vunpack.c.h.b16 %v295
    %v1003 = vunpack.c.l.b16 %v296
    %v1004 = vunpack.c.h.b16 %v296
    %v1005 = vunpack.c.l.b16 %v297
    %v1006 = vunpack.c.h.b16 %v297
    %v1007 = vunpack.c.l.b16 %v298
    %v1008 = vunpack.c.h.b16 %v298
    %v1009 = vunpack.c.l.b16 %v299
    %v1010 = vunpack.c.h.b16 %v299
    %v1011 = vunpack.c.l.b16 %v300
    %v1012 = vunpack.c.h.b16 %v300
    %v1013 = vunpack.c.l.b16 %v301
    %v1014 = vunpack.c.h.b16 %v301
    %v1015 = vunpack.c.l.b16 %v302
    %v1016 = vunpack.c.h.b16 %v302
    %v1017 = vunpack.c.l.b16 %v303
    %v1018 = vunpack.c.h.b16 %v303
    %v1019 = vunpack.c.l.b16 %v304
    %v1020 = vunpack.c.h.b16 %v304
    %v1021 = vunpack.c.l.b16 %v305
    %v1022 = vunpack.c.h.b16 %v305
    %v1023 = vunpack.c.l.b16 %v306
    %v1024 = vunpack.c.h.b16 %v306
    %v1025 = vunpack.c.l.b16 %v307
    %v1026 = vunpack.c.h.b16 %v307
    %v1027 = vunpack.c.l.b16 %v308
    %v1028 = vunpack.c.h.b16 %v308
    %v1029 = vunpack.c.l.b16 %v309
    %v1030 = vunpack.c.h.b16 %v309
    %v1031 = vunpack.c.l.b16 %v310
    %v1032 = vunpack.c.h.b16 %v310
    %v1033 = vunpack.c.l.b16 %v311
    %v1034 = vunpack.c.h.b16 %v311
    %v1035 = vunpack.c.l.b16 %v312
    %v1036 = vunpack.c.h.b16 %v312
    %v1037 = vunpack.c.l.b16 %v313
    %v1038 = vunpack.c.h.b16 %v313
    %v1039 = vunpack.c.l.b16 %v314
    %v1040 = vunpack.c.h.b16 %v314
    %v1041 = vunpack.c.l.b16 %v315
    %v1042 = vunpack.c.h.b16 %v315
    %v1043 = vunpack.c.l.b16 %v316
    %v1044 = vunpack.c.h.b16 %v316
    %v1045 = vunpack.c.l.b16 %v317
    %v1046 = vunpack.c.h.b16 %v317
    %v1047 = vunpack.c.l.b16 %v318
    %v1048 = vunpack.c.h.b16 %v318
    %v1049 = vunpack.c.l.b16 %v319
    %v1050 = vunpack.c.h.b16 %v319
    %v1051 = vunpack.c.l.b16 %v320
    %v1052 = vunpack.c.h.b16 %v320
    %v1053 = vunpack.c.l.b16 %v321
    %v1054 = vunpack.c.h.b16 %v321
    %v1055 = vunpack.c.l.b16 %v322
    %v1056 = vunpack.c.h.b16 %v322
    %v1057 = vunpack.c.l.b16 %v323
    %v1058 = vunpack.c.h.b16 %v323
    %v1059 = vunpack.c.l.b16 %v324
    %v1060 = vunpack.c.h.b16 %v324
    %v1061 = vunpack.c.l.b16 %v325
    %v1062 = vunpack.c.h.b16 %v325
    %v1063 = vunpack.c.l.b16 %v326
    %v1064 = vunpack.c.h.b16 %v326
    %v1065 = vunpack.c.l.b16 %v327
    %v1066 = vunpack.c.h.b16 %v327
    %v1067 = vunpack.c.l.b16 %v328
    %v1068 = vunpack.c.h.b16 %v328
    %v1069 = vunpack.c.l.b16 %v329
    %v1070 = vunpack.c.h.b16 %v329
    %v1071 = vunpack.c.l.b16 %v330
    %v1072 = vunpack.c.h.b16 %v330
    %v1073 = vunpack.c.l.b16 %v331
    %v1074 = vunpack.c.h.b16 %v331
    %v1075 = vunpack.c.l.b16 %v332
    %v1076 = vunpack.c.h.b16 %v332
    %v1077 = vunpack.c.l.b16 %v333
    %v1078 = vunpack.c.h.b16 %v333
    %v1079 = vunpack.c.l.b16 %v334
    %v1080 = vunpack.c.h.b16 %v334
    %v1081 = vunpack.c.l.b16 %v335
    %v1082 = vunpack.c.h.b16 %v335
    %v1083 = vunpack.c.l.b16 %v336
    %v1084 = vunpack.c.h.b16 %v336
    %v1085 = vunpack.c.l.b16 %v337
    %v1086 = vunpack.c.h.b16 %v337
    %v1087 = vunpack.c.l.b16 %v338
    %v1088 = vunpack.c.h.b16 %v338
    %v1089 = vunpack.c.l.b16 %v339
    %v1090 = vunpack.c.h.b16 %v339
    %v1091 = vunpack.c.l.b16 %v340
    %v1092 = vunpack.c.h.b16 %v340
    %v1093 = vunpack.c.l.b16 %v341
    %v1094 = vunpack.c.h.b16 %v341
    %v1095 = vunpack.c.l.b16 %v342
    %v1096 = vunpack.c.h.b16 %v342
    %v1097 = vunpack.c.l.b16 %v343
    %v1098 = vunpack.c.h.b16 %v343
    %v1099 = vunpack.c.l.b16 %v344
    %v1100 = vunpack.c.h.b16 %v344
    %v1101 = vunpack.c.l.b16 %v345
    %v1102 = vunpack.c.h.b16 %v345
    %v1103 = vunpack.c.l.b16 %v346
    %v1104 = vunpack.c.h.b16 %v346
    %v1105 = vunpack.c.l.b16 %v347
    %v1106 = vunpack.c.h.b16 %v347
    %v1107 = vunpack.c.l.b16 %v348
    %v1108 = vunpack.c.h.b16 %v348
    %v1109 = vunpack.c.l.b16 %v349
    %v1110 = vunpack.c.h.b16 %v349
    %v1111 = vunpack.c.l.b16 %v350
    %v1112 = vunpack.c.h.b16 %v350
    %v1113 = vunpack.c.l.b16 %v351
    %v1114 = vunpack.c.h.b16 %v351
    %v1115 = vunpack.c.l.b16 %v352
    %v1116 = vunpack.c.h.b16 %v352
    %v1117 = vunpack.c.l.b16 %v353
    %v1118 = vunpack.c.h.b16 %v353
    %v1119 = vunpack.c.l.b16 %v354
    %v1120 = vunpack.c.h.b16 %v354
    %v1121 = vunpack.c.l.b16 %v355
    %v1122 = vunpack.c.h.b16 %v355
    %v1123 = vunpack.c.l.b16 %v356
    %v1124 = vunpack.c.h.b16 %v356
    %v1125 = vunpack.c.l.b16 %v357
    %v1126 = vunpack.c.h.b16 %v357
    %v1127 = vunpack.c.l.b16 %v358
    %v1128 = vunpack.c.h.b16 %v358
    %v1129 = vunpack.c.l.b16 %v359
    %v1130 = vunpack.c.h.b16 %v359
    %v1131 = vunpack.c.l.b16 %v360
    %v1132 = vunpack.c.h.b16 %v360
    %v1133 = vunpack.c.l.b16 %v361
    %v1134 = vunpack.c.h.b16 %v361
    %v1135 = vunpack.c.l.b16 %v362
    %v1136 = vunpack.c.h.b16 %v362
    %v1137 = vunpack.c.l.b16 %v363
    %v1138 = vunpack.c.h.b16 %v363
    %v1139 = vunpack.c.l.b16 %v364
    %v1140 = vunpack.c.h.b16 %v364
    %v1141 = vunpack.c.l.b16 %v365
    %v1142 = vunpack.c.h.b16 %v365
    %v1143 = vunpack.c.l.b16 %v366
    %v1144 = vunpack.c.h.b16 %v366
    %v1145 = vunpack.c.l.b16 %v367
    %v1146 = vunpack.c.h.b16 %v367
    %v1147 = vunpack.c.l.b16 %v368
    %v1148 = vunpack.c.h.b16 %v368
    %v1149 = vpack.c.b16 %v639, %v637
    %v1150 = vpack.c.b16 %v640, %v638
    %v1151 = vpack.c.b16 %v643, %v641
    %v1152 = vpack.c.b16 %v644, %v642
    %v1153 = vpack.c.b16 %v647, %v645
    %v1154 = vpack.c.b16 %v648, %v646
    %v1155 = vpack.c.b16 %v651, %v649
    %v1156 = vpack.c.b16 %v652, %v650
    %v1157 = vpack.c.b16 %v655, %v653
    %v1158 = vpack.c.b16 %v656, %v654
    %v1159 = vpack.c.b16 %v659, %v657
    %v1160 = vpack.c.b16 %v660, %v658
    %v1161 = vpack.c.b16 %v663, %v661
    %v1162 = vpack.c.b16 %v664, %v662
    %v1163 = vpack.c.b16 %v667, %v665
    %v1164 = vpack.c.b16 %v668, %v666
    %v1165 = vpack.c.b16 %v671, %v669
    %v1166 = vpack.c.b16 %v672, %v670
    %v1167 = vpack.c.b16 %v675, %v673
    %v1168 = vpack.c.b16 %v676, %v674
    %v1169 = vpack.c.b16 %v679, %v677
    %v1170 = vpack.c.b16 %v680, %v678
    %v1171 = vpack.c.b16 %v683, %v681
    %v1172 = vpack.c.b16 %v684, %v682
    %v1173 = vpack.c.b16 %v687, %v685
    %v1174 = vpack.c.b16 %v688, %v686
    %v1175 = vpack.c.b16 %v691, %v689
    %v1176 = vpack.c.b16 %v692, %v690
    %v1177 = vpack.c.b16 %v695, %v693
    %v1178 = vpack.c.b16 %v696, %v694
    %v1179 = vpack.c.b16 %v699, %v697
    %v1180 = vpack.c.b16 %v700, %v698
    %v1181 = vpack.c.b16 %v703, %v701
    %v1182 = vpack.c.b16 %v704, %v702
    %v1183 = vpack.c.b16 %v707, %v705
    %v1184 = vpack.c.b16 %v708, %v706
    %v1185 = vpack.c.b16 %v711, %v709
    %v1186 = vpack.c.b16 %v712, %v710
    %v1187 = vpack.c.b16 %v715, %v713
    %v1188 = vpack.c.b16 %v716, %v714
    %v1189 = vpack.c.b16 %v719, %v717
    %v1190 = vpack.c.b16 %v720, %v718
    %v1191 = vpack.c.b16 %v723, %v721
    %v1192 = vpack.c.b16 %v724, %v722
    %v1193 = vpack.c.b16 %v727, %v725
    %v1194 = vpack.c.b16 %v728, %v726
    %v1195 = vpack.c.b16 %v731, %v729
    %v1196 = vpack.c.b16 %v732, %v730
    %v1197 = vpack.c.b16 %v735, %v733
    %v1198 = vpack.c.b16 %v736, %v734
    %v1199 = vpack.c.b16 %v739, %v737
    %v1200 = vpack.c.b16 %v740, %v738
    %v1201 = vpack.c.b16 %v743, %v741
    %v1202 = vpack.c.b16 %v744, %v742
    %v1203 = vpack.c.b16 %v747, %v745
    %v1204 = vpack.c.b16 %v748, %v746
    %v1205 = vpack.c.b16 %v751, %v749
    %v1206 = vpack.c.b16 %v752, %v750
    %v1207 = vpack.c.b16 %v755, %v753
    %v1208 = vpack.c.b16 %v756, %v754
    %v1209 = vpack.c.b16 %v759, %v757
    %v1210 = vpack.c.b16 %v760, %v758
    %v1211 = vpack.c.b16 %v763, %v761
    %v1212 = vpack.c.b16 %v764, %v762
    %v1213 = vpack.c.b16 %v767, %v765
    %v1214 = vpack.c.b16 %v768, %v766
    %v1215 = vpack.c.b16 %v771, %v769
    %v1216 = vpack.c.b16 %v772, %v770
    %v1217 = vpack.c.b16 %v775, %v773
    %v1218 = vpack.c.b16 %v776, %v774
    %v1219 = vpack.c.b16 %v779, %v777
    %v1220 = vpack.c.b16 %v780, %v778
    %v1221 = vpack.c.b16 %v783, %v781
    %v1222 = vpack.c.b16 %v784, %v782
    %v1223 = vpack.c.b16 %v787, %v785
    %v1224 = vpack.c.b16 %v788, %v786
    %v1225 = vpack.c.b16 %v791, %v789
    %v1226 = vpack.c.b16 %v792, %v790
    %v1227 = vpack.c.b16 %v795, %v793
    %v1228 = vpack.c.b16 %v796, %v794
    %v1229 = vpack.c.b16 %v799, %v797
    %v1230 = vpack.c.b16 %v800, %v798
    %v1231 = vpack.c.b16 %v803, %v801
    %v1232 = vpack.c.b16 %v804, %v802
    %v1233 = vpack.c.b16 %v807, %v805
    %v1234 = vpack.c.b16 %v808, %v806
    %v1235 = vpack.c.b16 %v811, %v809
    %v1236 = vpack.c.b16 %v812, %v810
    %v1237 = vpack.c.b16 %v815, %v813
    %v1238 = vpack.c.b16 %v816, %v814
    %v1239 = vpack.c.b16 %v819, %v817
    %v1240 = vpack.c.b16 %v820, %v818
    %v1241 = vpack.c.b16 %v823, %v821
    %v1242 = vpack.c.b16 %v824, %v822
    %v1243 = vpack.c.b16 %v827, %v825
    %v1244 = vpack.c.b16 %v828, %v826
    %v1245 = vpack.c.b16 %v831, %v829
    %v1246 = vpack.c.b16 %v832, %v830
    %v1247 = vpack.c.b16 %v835, %v833
    %v1248 = vpack.c.b16 %v836, %v834
    %v1249 = vpack.c.b16 %v839, %v837
    %v1250 = vpack.c.b16 %v840, %v838
    %v1251 = vpack.c.b16 %v843, %v841
    %v1252 = vpack.c.b16 %v844, %v842
    %v1253 = vpack.c.b16 %v847, %v845
    %v1254 = vpack.c.b16 %v848, %v846
    %v1255 = vpack.c.b16 %v851, %v849
    %v1256 = vpack.c.b16 %v852, %v850
    %v1257 = vpack.c.b16 %v855, %v853
    %v1258 = vpack.c.b16 %v856, %v854
    %v1259 = vpack.c.b16 %v859, %v857
    %v1260 = vpack.c.b16 %v860, %v858
    %v1261 = vpack.c.b16 %v863, %v861
    %v1262 = vpack.c.b16 %v864, %v862
    %v1263 = vpack.c.b16 %v867, %v865
    %v1264 = vpack.c.b16 %v868, %v866
    %v1265 = vpack.c.b16 %v871, %v869
    %v1266 = vpack.c.b16 %v872, %v870
    %v1267 = vpack.c.b16 %v875, %v873
    %v1268 = vpack.c.b16 %v876, %v874
    %v1269 = vpack.c.b16 %v879, %v877
    %v1270 = vpack.c.b16 %v880, %v878
    %v1271 = vpack.c.b16 %v883, %v881
    %v1272 = vpack.c.b16 %v884, %v882
    %v1273 = vpack.c.b16 %v887, %v885
    %v1274 = vpack.c.b16 %v888, %v886
    %v1275 = vpack.c.b16 %v891, %v889
    %v1276 = vpack.c.b16 %v892, %v890
    %v1277 = vpack.c.b16 %v895, %v893
    %v1278 = vpack.c.b16 %v896, %v894
    %v1279 = vpack.c.b16 %v899, %v897
    %v1280 = vpack.c.b16 %v900, %v898
    %v1281 = vpack.c.b16 %v903, %v901
    %v1282 = vpack.c.b16 %v904, %v902
    %v1283 = vpack.c.b16 %v907, %v905
    %v1284 = vpack.c.b16 %v908, %v906
    %v1285 = vpack.c.b16 %v911, %v909
    %v1286 = vpack.c.b16 %v912, %v910
    %v1287 = vpack.c.b16 %v915, %v913
    %v1288 = vpack.c.b16 %v916, %v914
    %v1289 = vpack.c.b16 %v919, %v917
    %v1290 = vpack.c.b16 %v920, %v918
    %v1291 = vpack.c.b16 %v923, %v921
    %v1292 = vpack.c.b16 %v924, %v922
    %v1293 = vpack.c.b16 %v927, %v925
    %v1294 = vpack.c.b16 %v928, %v926
    %v1295 = vpack.c.b16 %v931, %v929
    %v1296 = vpack.c.b16 %v932, %v930
    %v1297 = vpack.c.b16 %v935, %v933
    %v1298 = vpack.c.b16 %v936, %v934
    %v1299 = vpack.c.b16 %v939, %v937
    %v1300 = vpack.c.b16 %v940, %v938
    %v1301 = vpack.c.b16 %v943, %v941
    %v1302 = vpack.c.b16 %v944, %v942
    %v1303 = vpack.c.b16 %v947, %v945
    %v1304 = vpack.c.b16 %v948, %v946
    %v1305 = vpack.c.b16 %v951, %v949
    %v1306 = vpack.c.b16 %v952, %v950
    %v1307 = vpack.c.b16 %v955, %v953
    %v1308 = vpack.c.b16 %v956, %v954
    %v1309 = vpack.c.b16 %v959, %v957
    %v1310 = vpack.c.b16 %v960, %v958
    %v1311 = vpack.c.b16 %v963, %v961
    %v1312 = vpack.c.b16 %v964, %v962
    %v1313 = vpack.c.b16 %v967, %v965
    %v1314 = vpack.c.b16 %v968, %v966
    %v1315 = vpack.c.b16 %v971, %v969
    %v1316 = vpack.c.b16 %v972, %v970
    %v1317 = vpack.c.b16 %v975, %v973
    %v1318 = vpack.c.b16 %v976, %v974
    %v1319 = vpack.c.b16 %v979, %v977
    %v1320 = vpack.c.b16 %v980, %v978
    %v1321 = vpack.c.b16 %v983, %v981
    %v1322 = vpack.c.b16 %v984, %v982
    %v1323 = vpack.c.b16 %v987, %v985
    %v1324 = vpack.c.b16 %v988, %v986
    %v1325 = vpack.c.b16 %v991, %v989
    %v1326 = vpack.c.b16 %v992, %v990
    %v1327 = vpack.c.b16 %v995, %v993
    %v1328 = vpack.c.b16 %v996, %v994
    %v1329 = vpack.c.b16 %v999, %v997
    %v1330 = vpack.c.b16 %v1000, %v998
    %v1331 = vpack.c.b16 %v1003, %v1001
    %v1332 = vpack.c.b16 %v1004, %v1002
    %v1333 = vpack.c.b16 %v1007, %v1005
    %v1334 = vpack.c.b16 %v1008, %v1006
    %v1335 = vpack.c.b16 %v1011, %v1009
    %v1336 = vpack.c.b16 %v1012, %v1010
    %v1337 = vpack.c.b16 %v1015, %v1013
    %v1338 = vpack.c.b16 %v1016, %v1014
    %v1339 = vpack.c.b16 %v1019, %v1017
    %v1340 = vpack.c.b16 %v1020, %v1018
    %v1341 = vpack.c.b16 %v1023, %v1021
    %v1342 = vpack.c.b16 %v1024, %v1022
    %v1343 = vpack.c.b16 %v1027, %v1025
    %v1344 = vpack.c.b16 %v1028, %v1026
    %v1345 = vpack.c.b16 %v1031, %v1029
    %v1346 = vpack.c.b16 %v1032, %v1030
    %v1347 = vpack.c.b16 %v1035, %v1033
    %v1348 = vpack.c.b16 %v1036, %v1034
    %v1349 = vpack.c.b16 %v1039, %v1037
    %v1350 = vpack.c.b16 %v1040, %v1038
    %v1351 = vpack.c.b16 %v1043, %v1041
    %v1352 = vpack.c.b16 %v1044, %v1042
    %v1353 = vpack.c.b16 %v1047, %v1045
    %v1354 = vpack.c.b16 %v1048, %v1046
    %v1355 = vpack.c.b16 %v1051, %v1049
    %v1356 = vpack.c.b16 %v1052, %v1050
    %v1357 = vpack.c.b16 %v1055, %v1053
    %v1358 = vpack.c.b16 %v1056, %v1054
    %v1359 = vpack.c.b16 %v1059, %v1057
    %v1360 = vpack.c.b16 %v1060, %v1058
    %v1361 = vpack.c.b16 %v1063, %v1061
    %v1362 = vpack.c.b16 %v1064, %v1062
    %v1363 = vpack.c.b16 %v1067, %v1065
    %v1364 = vpack.c.b16 %v1068, %v1066
    %v1365 = vpack.c.b16 %v1071, %v1069
    %v1366 = vpack.c.b16 %v1072, %v1070
    %v1367 = vpack.c.b16 %v1075, %v1073
    %v1368 = vpack.c.b16 %v1076, %v1074
    %v1369 = vpack.c.b16 %v1079, %v1077
    %v1370 = vpack.c.b16 %v1080, %v1078
    %v1371 = vpack.c.b16 %v1083, %v1081
    %v1372 = vpack.c.b16 %v1084, %v1082
    %v1373 = vpack.c.b16 %v1087, %v1085
    %v1374 = vpack.c.b16 %v1088, %v1086
    %v1375 = vpack.c.b16 %v1091, %v1089
    %v1376 = vpack.c.b16 %v1092, %v1090
    %v1377 = vpack.c.b16 %v1095, %v1093
    %v1378 = vpack.c.b16 %v1096, %v1094
    %v1379 = vpack.c.b16 %v1099, %v1097
    %v1380 = vpack.c.b16 %v1100, %v1098
    %v1381 = vpack.c.b16 %v1103, %v1101
    %v1382 = vpack.c.b16 %v1104, %v1102
    %v1383 = vpack.c.b16 %v1107, %v1105
    %v1384 = vpack.c.b16 %v1108, %v1106
    %v1385 = vpack.c.b16 %v1111, %v1109
    %v1386 = vpack.c.b16 %v1112, %v1110
    %v1387 = vpack.c.b16 %v1115, %v1113
    %v1388 = vpack.c.b16 %v1116, %v1114
    %v1389 = vpack.c.b16 %v1119, %v1117
    %v1390 = vpack.c.b16 %v1120, %v1118
    %v1391 = vpack.c.b16 %v1123, %v1121
    %v1392 = vpack.c.b16 %v1124, %v1122
    %v1393 = vpack.c.b16 %v1127, %v1125
    %v1394 = vpack.c.b16 %v1128, %v1126
    %v1395 = vpack.c.b16 %v1131, %v1129
    %v1396 = vpack.c.b16 %v1132, %v1130
    %v1397 = vpack.c.b16 %v1135, %v1133
    %v1398 = vpack.c.b16 %v1136, %v1134
    %v1399 = vpack.c.b16 %v1139, %v1137
    %v1400 = vpack.c.b16 %v1140, %v1138
    %v1401 = vpack.c.b16 %v1143, %v1141
    %v1402 = vpack.c.b16 %v1144, %v1142
    %v1403 = vpack.c.b16 %v1147, %v1145
    %v1404 = vpack.c.b16 %v1148, %v1146
    %1661 = vmatprep.subr.bf16.mxu0 %v1150
    %1662 = vmatpush1.bf16.msra.mxu0 %v1149
    %1663 = vmatprep.subr.bf16.mxu0 %v1152
    %1664 = vmatpush1.bf16.msra.mxu0 %v1151
    %1665 = vmatprep.subr.bf16.mxu0 %v1154
    %1666 = vmatpush1.bf16.msra.mxu0 %v1153
    %1667 = vmatprep.subr.bf16.mxu0 %v1156
    %1668 = vmatpush1.bf16.msra.mxu0 %v1155
    %1669 = vmatprep.subr.bf16.mxu0 %v1158
    %1670 = vmatpush1.bf16.msra.mxu0 %v1157
    %1671 = vmatprep.subr.bf16.mxu0 %v1160
    %1672 = vmatpush1.bf16.msra.mxu0 %v1159
    %1673 = vmatprep.subr.bf16.mxu0 %v1162
    %1674 = vmatpush1.bf16.msra.mxu0 %v1161
    %1675 = vmatprep.subr.bf16.mxu0 %v1164
    %1676 = vmatpush1.bf16.msra.mxu0 %v1163
    %1677 = vmatprep.subr.bf16.mxu0 %v1166
    %1678 = vmatpush1.bf16.msra.mxu0 %v1165
    %1679 = vmatprep.subr.bf16.mxu0 %v1168
    %1680 = vmatpush1.bf16.msra.mxu0 %v1167
    %1681 = vmatprep.subr.bf16.mxu0 %v1170
    %1682 = vmatpush1.bf16.msra.mxu0 %v1169
    %1683 = vmatprep.subr.bf16.mxu0 %v1172
    %1684 = vmatpush1.bf16.msra.mxu0 %v1171
    %1685 = vmatprep.subr.bf16.mxu0 %v1174
    %1686 = vmatpush1.bf16.msra.mxu0 %v1173
    %1687 = vmatprep.subr.bf16.mxu0 %v1176
    %1688 = vmatpush1.bf16.msra.mxu0 %v1175
    %1689 = vmatprep.subr.bf16.mxu0 %v1178
    %1690 = vmatpush1.bf16.msra.mxu0 %v1177
    %1691 = vmatprep.subr.bf16.mxu0 %v1180
    %1692 = vmatpush1.bf16.msra.mxu0 %v1179
    %1693 = vmatprep.mubr.bf16.mxu0 %v98
    %1694 = vmatmul.mubr.bf16.gmra.mrb[0].mxu0 %v97
    %v1695 = vpop.f32.mrb[0].mxu0
    %v1696 = vadd.f32 %v374, %v1695
    %v1697 = vpop.f32.mrb[0].mxu0
    %v1698 = vadd.f32 %v378, %v1697
    %v1699 = vpop.f32.mrb[0].mxu0
    %v1700 = vpop.f32.mrb[0].mxu0
    %1701 = vdwg.mxu0
    %1702 = vmatprep.subr.bf16.mxu0 %v1182
    %1703 = vmatpush1.bf16.msra.mxu0 %v1181
    %1704 = vmatprep.subr.bf16.mxu0 %v1184
    %1705 = vmatpush1.bf16.msra.mxu0 %v1183
    %1706 = vmatprep.subr.bf16.mxu0 %v1186
    %1707 = vmatpush1.bf16.msra.mxu0 %v1185
    %1708 = vmatprep.subr.bf16.mxu0 %v1188
    %1709 = vmatpush1.bf16.msra.mxu0 %v1187
    %1710 = vmatprep.subr.bf16.mxu0 %v1190
    %1711 = vmatpush1.bf16.msra.mxu0 %v1189
    %1712 = vmatprep.subr.bf16.mxu0 %v1192
    %1713 = vmatpush1.bf16.msra.mxu0 %v1191
    %1714 = vmatprep.subr.bf16.mxu0 %v1194
    %1715 = vmatpush1.bf16.msra.mxu0 %v1193
    %1716 = vmatprep.subr.bf16.mxu0 %v1196
    %1717 = vmatpush1.bf16.msra.mxu0 %v1195
    %1718 = vmatprep.subr.bf16.mxu0 %v1198
    %1719 = vmatpush1.bf16.msra.mxu0 %v1197
    %1720 = vmatprep.subr.bf16.mxu0 %v1200
    %1721 = vmatpush1.bf16.msra.mxu0 %v1199
    %1722 = vmatprep.subr.bf16.mxu0 %v1202
    %1723 = vmatpush1.bf16.msra.mxu0 %v1201
    %1724 = vmatprep.subr.bf16.mxu0 %v1204
    %1725 = vmatpush1.bf16.msra.mxu0 %v1203
    %1726 = vmatprep.subr.bf16.mxu0 %v1206
    %1727 = vmatpush1.bf16.msra.mxu0 %v1205
    %1728 = vmatprep.subr.bf16.mxu0 %v1208
    %1729 = vmatpush1.bf16.msra.mxu0 %v1207
    %1730 = vmatprep.subr.bf16.mxu0 %v1210
    %1731 = vmatpush1.bf16.msra.mxu0 %v1209
    %1732 = vmatprep.subr.bf16.mxu0 %v1212
    %1733 = vmatpush1.bf16.msra.mxu0 %v1211
    %1734 = vmatprep.mubr.bf16.mxu0 %v100
    %1735 = vmatmul.mubr.bf16.gmra.mrb[0].mxu0 %v99
    %v1736 = vpop.f32.mrb[0].mxu0
    %v1737 = vadd.f32 %v1696, %v1736
    %v1738 = vpop.f32.mrb[0].mxu0
    %v1739 = vadd.f32 %v1698, %v1738
    %v1740 = vpop.f32.mrb[0].mxu0
    %v1741 = vpop.f32.mrb[0].mxu0
    %1742 = vdwg.mxu0
    %1743 = vmatprep.subr.bf16.mxu0 %v1214
    %1744 = vmatpush1.bf16.msra.mxu0 %v1213
    %1745 = vmatprep.subr.bf16.mxu0 %v1216
    %1746 = vmatpush1.bf16.msra.mxu0 %v1215
    %1747 = vmatprep.subr.bf16.mxu0 %v1218
    %1748 = vmatpush1.bf16.msra.mxu0 %v1217
    %1749 = vmatprep.subr.bf16.mxu0 %v1220
    %1750 = vmatpush1.bf16.msra.mxu0 %v1219
    %1751 = vmatprep.subr.bf16.mxu0 %v1222
    %1752 = vmatpush1.bf16.msra.mxu0 %v1221
    %1753 = vmatprep.subr.bf16.mxu0 %v1224
    %1754 = vmatpush1.bf16.msra.mxu0 %v1223
    %1755 = vmatprep.subr.bf16.mxu0 %v1226
    %1756 = vmatpush1.bf16.msra.mxu0 %v1225
    %1757 = vmatprep.subr.bf16.mxu0 %v1228
    %1758 = vmatpush1.bf16.msra.mxu0 %v1227
    %1759 = vmatprep.subr.bf16.mxu0 %v1230
    %1760 = vmatpush1.bf16.msra.mxu0 %v1229
    %1761 = vmatprep.subr.bf16.mxu0 %v1232
    %1762 = vmatpush1.bf16.msra.mxu0 %v1231
    %1763 = vmatprep.subr.bf16.mxu0 %v1234
    %1764 = vmatpush1.bf16.msra.mxu0 %v1233
    %1765 = vmatprep.subr.bf16.mxu0 %v1236
    %1766 = vmatpush1.bf16.msra.mxu0 %v1235
    %1767 = vmatprep.subr.bf16.mxu0 %v1238
    %1768 = vmatpush1.bf16.msra.mxu0 %v1237
    %1769 = vmatprep.subr.bf16.mxu0 %v1240
    %1770 = vmatpush1.bf16.msra.mxu0 %v1239
    %1771 = vmatprep.subr.bf16.mxu0 %v1242
    %1772 = vmatpush1.bf16.msra.mxu0 %v1241
    %1773 = vmatprep.subr.bf16.mxu0 %v1244
    %1774 = vmatpush1.bf16.msra.mxu0 %v1243
    %1775 = vmatprep.mubr.bf16.mxu0 %v102
    %1776 = vmatmul.mubr.bf16.gmra.mrb[0].mxu0 %v101
    %v1777 = vpop.f32.mrb[0].mxu0
    %v1778 = vadd.f32 %v1737, %v1777
    %v1779 = vpop.f32.mrb[0].mxu0
    %v1780 = vadd.f32 %v1739, %v1779
    %v1781 = vpop.f32.mrb[0].mxu0
    %v1782 = vpop.f32.mrb[0].mxu0
    %1783 = vdwg.mxu0
    %1784 = vmatprep.subr.bf16.mxu0 %v1246
    %1785 = vmatpush1.bf16.msra.mxu0 %v1245
    %1786 = vmatprep.subr.bf16.mxu0 %v1248
    %1787 = vmatpush1.bf16.msra.mxu0 %v1247
    %1788 = vmatprep.subr.bf16.mxu0 %v1250
    %1789 = vmatpush1.bf16.msra.mxu0 %v1249
    %1790 = vmatprep.subr.bf16.mxu0 %v1252
    %1791 = vmatpush1.bf16.msra.mxu0 %v1251
    %1792 = vmatprep.subr.bf16.mxu0 %v1254
    %1793 = vmatpush1.bf16.msra.mxu0 %v1253
    %1794 = vmatprep.subr.bf16.mxu0 %v1256
    %1795 = vmatpush1.bf16.msra.mxu0 %v1255
    %1796 = vmatprep.subr.bf16.mxu0 %v1258
    %1797 = vmatpush1.bf16.msra.mxu0 %v1257
    %1798 = vmatprep.subr.bf16.mxu0 %v1260
    %1799 = vmatpush1.bf16.msra.mxu0 %v1259
    %1800 = vmatprep.subr.bf16.mxu0 %v1262
    %1801 = vmatpush1.bf16.msra.mxu0 %v1261
    %1802 = vmatprep.subr.bf16.mxu0 %v1264
    %1803 = vmatpush1.bf16.msra.mxu0 %v1263
    %1804 = vmatprep.subr.bf16.mxu0 %v1266
    %1805 = vmatpush1.bf16.msra.mxu0 %v1265
    %1806 = vmatprep.subr.bf16.mxu0 %v1268
    %1807 = vmatpush1.bf16.msra.mxu0 %v1267
    %1808 = vmatprep.subr.bf16.mxu0 %v1270
    %1809 = vmatpush1.bf16.msra.mxu0 %v1269
    %1810 = vmatprep.subr.bf16.mxu0 %v1272
    %1811 = vmatpush1.bf16.msra.mxu0 %v1271
    %1812 = vmatprep.subr.bf16.mxu0 %v1274
    %1813 = vmatpush1.bf16.msra.mxu0 %v1273
    %1814 = vmatprep.subr.bf16.mxu0 %v1276
    %1815 = vmatpush1.bf16.msra.mxu0 %v1275
    %1816 = vmatprep.mubr.bf16.mxu0 %v104
    %1817 = vmatmul.mubr.bf16.gmra.mrb[0].mxu0 %v103
    %v1818 = vpop.f32.mrb[0].mxu0
    %v1819 = vadd.f32 %v1778, %v1818
    %v1820 = vpop.f32.mrb[0].mxu0
    %v1821 = vadd.f32 %v1780, %v1820
    %v1822 = vpop.f32.mrb[0].mxu0
    %v1823 = vpop.f32.mrb[0].mxu0
    %1824 = vdwg.mxu0
    %1825 = vmatprep.subr.bf16.mxu0 %v1278
    %1826 = vmatpush1.bf16.msra.mxu0 %v1277
    %1827 = vmatprep.subr.bf16.mxu0 %v1280
    %1828 = vmatpush1.bf16.msra.mxu0 %v1279
    %1829 = vmatprep.subr.bf16.mxu0 %v1282
    %1830 = vmatpush1.bf16.msra.mxu0 %v1281
    %1831 = vmatprep.subr.bf16.mxu0 %v1284
    %1832 = vmatpush1.bf16.msra.mxu0 %v1283
    %1833 = vmatprep.subr.bf16.mxu0 %v1286
    %1834 = vmatpush1.bf16.msra.mxu0 %v1285
    %1835 = vmatprep.subr.bf16.mxu0 %v1288
    %1836 = vmatpush1.bf16.msra.mxu0 %v1287
    %1837 = vmatprep.subr.bf16.mxu0 %v1290
    %1838 = vmatpush1.bf16.msra.mxu0 %v1289
    %1839 = vmatprep.subr.bf16.mxu0 %v1292
    %1840 = vmatpush1.bf16.msra.mxu0 %v1291
    %1841 = vmatprep.subr.bf16.mxu0 %v1294
    %1842 = vmatpush1.bf16.msra.mxu0 %v1293
    %1843 = vmatprep.subr.bf16.mxu0 %v1296
    %1844 = vmatpush1.bf16.msra.mxu0 %v1295
    %1845 = vmatprep.subr.bf16.mxu0 %v1298
    %1846 = vmatpush1.bf16.msra.mxu0 %v1297
    %1847 = vmatprep.subr.bf16.mxu0 %v1300
    %1848 = vmatpush1.bf16.msra.mxu0 %v1299
    %1849 = vmatprep.subr.bf16.mxu0 %v1302
    %1850 = vmatpush1.bf16.msra.mxu0 %v1301
    %1851 = vmatprep.subr.bf16.mxu0 %v1304
    %1852 = vmatpush1.bf16.msra.mxu0 %v1303
    %1853 = vmatprep.subr.bf16.mxu0 %v1306
    %1854 = vmatpush1.bf16.msra.mxu0 %v1305
    %1855 = vmatprep.subr.bf16.mxu0 %v1308
    %1856 = vmatpush1.bf16.msra.mxu0 %v1307
    %1857 = vmatprep.mubr.bf16.mxu0 %v106
    %1858 = vmatmul.mubr.bf16.gmra.mrb[0].mxu0 %v105
    %v1859 = vpop.f32.mrb[0].mxu0
    %v1860 = vadd.f32 %v1819, %v1859
    %v1861 = vpop.f32.mrb[0].mxu0
    %v1862 = vadd.f32 %v1821, %v1861
    %v1863 = vpop.f32.mrb[0].mxu0
    %v1864 = vpop.f32.mrb[0].mxu0
    %1865 = vdwg.mxu0
    %1866 = vmatprep.subr.bf16.mxu0 %v1310
    %1867 = vmatpush1.bf16.msra.mxu0 %v1309
    %1868 = vmatprep.subr.bf16.mxu0 %v1312
    %1869 = vmatpush1.bf16.msra.mxu0 %v1311
    %1870 = vmatprep.subr.bf16.mxu0 %v1314
    %1871 = vmatpush1.bf16.msra.mxu0 %v1313
    %1872 = vmatprep.subr.bf16.mxu0 %v1316
    %1873 = vmatpush1.bf16.msra.mxu0 %v1315
    %1874 = vmatprep.subr.bf16.mxu0 %v1318
    %1875 = vmatpush1.bf16.msra.mxu0 %v1317
    %1876 = vmatprep.subr.bf16.mxu0 %v1320
    %1877 = vmatpush1.bf16.msra.mxu0 %v1319
    %1878 = vmatprep.subr.bf16.mxu0 %v1322
    %1879 = vmatpush1.bf16.msra.mxu0 %v1321
    %1880 = vmatprep.subr.bf16.mxu0 %v1324
    %1881 = vmatpush1.bf16.msra.mxu0 %v1323
    %1882 = vmatprep.subr.bf16.mxu0 %v1326
    %1883 = vmatpush1.bf16.msra.mxu0 %v1325
    %1884 = vmatprep.subr.bf16.mxu0 %v1328
    %1885 = vmatpush1.bf16.msra.mxu0 %v1327
    %1886 = vmatprep.subr.bf16.mxu0 %v1330
    %1887 = vmatpush1.bf16.msra.mxu0 %v1329
    %1888 = vmatprep.subr.bf16.mxu0 %v1332
    %1889 = vmatpush1.bf16.msra.mxu0 %v1331
    %1890 = vmatprep.subr.bf16.mxu0 %v1334
    %1891 = vmatpush1.bf16.msra.mxu0 %v1333
    %1892 = vmatprep.subr.bf16.mxu0 %v1336
    %1893 = vmatpush1.bf16.msra.mxu0 %v1335
    %1894 = vmatprep.subr.bf16.mxu0 %v1338
    %1895 = vmatpush1.bf16.msra.mxu0 %v1337
    %1896 = vmatprep.subr.bf16.mxu0 %v1340
    %1897 = vmatpush1.bf16.msra.mxu0 %v1339
    %1898 = vmatprep.mubr.bf16.mxu0 %v108
    %1899 = vmatmul.mubr.bf16.gmra.mrb[0].mxu0 %v107
    %v1900 = vpop.f32.mrb[0].mxu0
    %v1901 = vadd.f32 %v1860, %v1900
    %v1902 = vpop.f32.mrb[0].mxu0
    %v1903 = vadd.f32 %v1862, %v1902
    %v1904 = vpop.f32.mrb[0].mxu0
    %v1905 = vpop.f32.mrb[0].mxu0
    %1906 = vdwg.mxu0
    %1907 = vmatprep.subr.bf16.mxu0 %v1342
    %1908 = vmatpush1.bf16.msra.mxu0 %v1341
    %1909 = vmatprep.subr.bf16.mxu0 %v1344
    %1910 = vmatpush1.bf16.msra.mxu0 %v1343
    %1911 = vmatprep.subr.bf16.mxu0 %v1346
    %1912 = vmatpush1.bf16.msra.mxu0 %v1345
    %1913 = vmatprep.subr.bf16.mxu0 %v1348
    %1914 = vmatpush1.bf16.msra.mxu0 %v1347
    %1915 = vmatprep.subr.bf16.mxu0 %v1350
    %1916 = vmatpush1.bf16.msra.mxu0 %v1349
    %1917 = vmatprep.subr.bf16.mxu0 %v1352
    %1918 = vmatpush1.bf16.msra.mxu0 %v1351
    %1919 = vmatprep.subr.bf16.mxu0 %v1354
    %1920 = vmatpush1.bf16.msra.mxu0 %v1353
    %1921 = vmatprep.subr.bf16.mxu0 %v1356
    %1922 = vmatpush1.bf16.msra.mxu0 %v1355
    %1923 = vmatprep.subr.bf16.mxu0 %v1358
    %1924 = vmatpush1.bf16.msra.mxu0 %v1357
    %1925 = vmatprep.subr.bf16.mxu0 %v1360
    %1926 = vmatpush1.bf16.msra.mxu0 %v1359
    %1927 = vmatprep.subr.bf16.mxu0 %v1362
    %1928 = vmatpush1.bf16.msra.mxu0 %v1361
    %1929 = vmatprep.subr.bf16.mxu0 %v1364
    %1930 = vmatpush1.bf16.msra.mxu0 %v1363
    %1931 = vmatprep.subr.bf16.mxu0 %v1366
    %1932 = vmatpush1.bf16.msra.mxu0 %v1365
    %1933 = vmatprep.subr.bf16.mxu0 %v1368
    %1934 = vmatpush1.bf16.msra.mxu0 %v1367
    %1935 = vmatprep.subr.bf16.mxu0 %v1370
    %1936 = vmatpush1.bf16.msra.mxu0 %v1369
    %1937 = vmatprep.subr.bf16.mxu0 %v1372
    %1938 = vmatpush1.bf16.msra.mxu0 %v1371
    %1939 = vmatprep.mubr.bf16.mxu0 %v110
    %1940 = vmatmul.mubr.bf16.gmra.mrb[0].mxu0 %v109
    %v1941 = vpop.f32.mrb[0].mxu0
    %v1942 = vadd.f32 %v1901, %v1941
    %v1943 = vpop.f32.mrb[0].mxu0
    %v1944 = vadd.f32 %v1903, %v1943
    %v1945 = vpop.f32.mrb[0].mxu0
    %v1946 = vpop.f32.mrb[0].mxu0
    %1947 = vdwg.mxu0
    %1948 = vmatprep.subr.bf16.mxu0 %v1374
    %1949 = vmatpush1.bf16.msra.mxu0 %v1373
    %1950 = vmatprep.subr.bf16.mxu0 %v1376
    %1951 = vmatpush1.bf16.msra.mxu0 %v1375
    %1952 = vmatprep.subr.bf16.mxu0 %v1378
    %1953 = vmatpush1.bf16.msra.mxu0 %v1377
    %1954 = vmatprep.subr.bf16.mxu0 %v1380
    %1955 = vmatpush1.bf16.msra.mxu0 %v1379
    %1956 = vmatprep.subr.bf16.mxu0 %v1382
    %1957 = vmatpush1.bf16.msra.mxu0 %v1381
    %1958 = vmatprep.subr.bf16.mxu0 %v1384
    %1959 = vmatpush1.bf16.msra.mxu0 %v1383
    %1960 = vmatprep.subr.bf16.mxu0 %v1386
    %1961 = vmatpush1.bf16.msra.mxu0 %v1385
    %1962 = vmatprep.subr.bf16.mxu0 %v1388
    %1963 = vmatpush1.bf16.msra.mxu0 %v1387
    %1964 = vmatprep.subr.bf16.mxu0 %v1390
    %1965 = vmatpush1.bf16.msra.mxu0 %v1389
    %1966 = vmatprep.subr.bf16.mxu0 %v1392
    %1967 = vmatpush1.bf16.msra.mxu0 %v1391
    %1968 = vmatprep.subr.bf16.mxu0 %v1394
    %1969 = vmatpush1.bf16.msra.mxu0 %v1393
    %1970 = vmatprep.subr.bf16.mxu0 %v1396
    %1971 = vmatpush1.bf16.msra.mxu0 %v1395
    %1972 = vmatprep.subr.bf16.mxu0 %v1398
    %1973 = vmatpush1.bf16.msra.mxu0 %v1397
    %1974 = vmatprep.subr.bf16.mxu0 %v1400
    %1975 = vmatpush1.bf16.msra.mxu0 %v1399
    %1976 = vmatprep.subr.bf16.mxu0 %v1402
    %1977 = vmatpush1.bf16.msra.mxu0 %v1401
    %1978 = vmatprep.subr.bf16.mxu0 %v1404
    %1979 = vmatpush1.bf16.msra.mxu0 %v1403
    %1980 = vmatprep.mubr.bf16.mxu0 %v112
    %1981 = vmatmul.mubr.bf16.gmra.mrb[0].mxu0 %v111
    %v1982 = vpop.f32.mrb[0].mxu0
    %v1983 = vadd.f32 %v1942, %v1982
    %v1984 = vpop.f32.mrb[0].mxu0
    %v1985 = vadd.f32 %v1944, %v1984
    %v1986 = vpop.f32.mrb[0].mxu0
    %v1987 = vpop.f32.mrb[0].mxu0
    %1988 = vdwg.mxu0
    %v1989 = vmax.f32 %v1983, 0.0
    %v1990 = vmax.f32 %v1985, 0.0
    %v1991 = vpack.c.bf16 %v1989, %v1989
    %v1992 = vpack.c.bf16 %v1990, %v1990
    %v1995 = vunpack.c.l.b16 %v1991
    %v1996 = vunpack.c.l.b16 %v1992
    %v1997 = vpack.c.b16 %v1996, %v1995
    %1999 = vst [vmem:[#allocation2] sm:$0xff] %v1997
    %v2000 = vld [vmem:[#allocation2] sm:$0xff]
    %v2001 = vld [vmem:[#allocation8] sm:$0xf]
    %v2002 = vld [vmem:[#allocation8 + $0x4] sm:$0xf]
    %v2003 = vld [vmem:[#allocation8 + $0x8] sm:$0xf]
    %v2004 = vld [vmem:[#allocation8 + $0xc] sm:$0xf]
    %v2005 = vld [vmem:[#allocation8 + $0x10] sm:$0xf]
    %v2006 = vld [vmem:[#allocation8 + $0x14] sm:$0xf]
    %v2007 = vld [vmem:[#allocation8 + $0x18] sm:$0xf]
    %v2008 = vld [vmem:[#allocation8 + $0x1c] sm:$0xf]
    %v2009 = vld [vmem:[#allocation8 + $0x20] sm:$0xf]
    %v2010 = vld [vmem:[#allocation8 + $0x24] sm:$0xf]
    %v2011 = vld [vmem:[#allocation8 + $0x28] sm:$0xf]
    %v2012 = vld [vmem:[#allocation8 + $0x2c] sm:$0xf]
    %v2013 = vld [vmem:[#allocation8 + $0x30] sm:$0xf]
    %v2014 = vld [vmem:[#allocation8 + $0x34] sm:$0xf]
    %v2015 = vld [vmem:[#allocation8 + $0x38] sm:$0xf]
    %v2016 = vld [vmem:[#allocation8 + $0x3c] sm:$0xf]
    %v2017 = vld [vmem:[#allocation8 + $0x40] sm:$0xf]
    %v2018 = vld [vmem:[#allocation8 + $0x44] sm:$0xf]
    %v2019 = vld [vmem:[#allocation8 + $0x48] sm:$0xf]
    %v2020 = vld [vmem:[#allocation8 + $0x4c] sm:$0xf]
    %v2021 = vld [vmem:[#allocation8 + $0x50] sm:$0xf]
    %v2022 = vld [vmem:[#allocation8 + $0x54] sm:$0xf]
    %v2023 = vld [vmem:[#allocation8 + $0x58] sm:$0xf]
    %v2024 = vld [vmem:[#allocation8 + $0x5c] sm:$0xf]
    %v2025 = vld [vmem:[#allocation8 + $0x60] sm:$0xf]
    %v2026 = vld [vmem:[#allocation8 + $0x64] sm:$0xf]
    %v2027 = vld [vmem:[#allocation8 + $0x68] sm:$0xf]
    %v2028 = vld [vmem:[#allocation8 + $0x6c] sm:$0xf]
    %v2029 = vld [vmem:[#allocation8 + $0x70] sm:$0xf]
    %v2030 = vld [vmem:[#allocation8 + $0x74] sm:$0xf]
    %v2031 = vld [vmem:[#allocation8 + $0x78] sm:$0xf]
    %v2032 = vld [vmem:[#allocation8 + $0x7c] sm:$0xf]
    %v2033 = vld [vmem:[%s4] sm:$0x1]
    %v2035 = vlaneseq
    %v2036 = vshrl.u32 %v2035, 7
    %v2037 = vsub.s32 0, %v2036
    %v2038 = vrot.slane %v2033, %v2037
    %v2041 = vunpack.c.l.b16 %v2000
    %v2042 = vunpack.c.h.b16 %v2000
    %v2043 = vpack.c.b16 %v2041, %v2041
    %v2044 = vpack.c.b16 %v2042, %v2042
    %v2079 = vunpack.c.l.b16 %v2001
    %v2080 = vunpack.c.l.b16 %v2002
    %v2081 = vunpack.c.l.b16 %v2003
    %v2082 = vunpack.c.l.b16 %v2004
    %v2083 = vunpack.c.l.b16 %v2005
    %v2084 = vunpack.c.l.b16 %v2006
    %v2085 = vunpack.c.l.b16 %v2007
    %v2086 = vunpack.c.l.b16 %v2008
    %v2087 = vunpack.c.l.b16 %v2009
    %v2088 = vunpack.c.l.b16 %v2010
    %v2089 = vunpack.c.l.b16 %v2011
    %v2090 = vunpack.c.l.b16 %v2012
    %v2091 = vunpack.c.l.b16 %v2013
    %v2092 = vunpack.c.l.b16 %v2014
    %v2093 = vunpack.c.l.b16 %v2015
    %v2094 = vunpack.c.l.b16 %v2016
    %v2095 = vunpack.c.l.b16 %v2017
    %v2096 = vunpack.c.l.b16 %v2018
    %v2097 = vunpack.c.l.b16 %v2019
    %v2098 = vunpack.c.l.b16 %v2020
    %v2099 = vunpack.c.l.b16 %v2021
    %v2100 = vunpack.c.l.b16 %v2022
    %v2101 = vunpack.c.l.b16 %v2023
    %v2102 = vunpack.c.l.b16 %v2024
    %v2103 = vunpack.c.l.b16 %v2025
    %v2104 = vunpack.c.l.b16 %v2026
    %v2105 = vunpack.c.l.b16 %v2027
    %v2106 = vunpack.c.l.b16 %v2028
    %v2107 = vunpack.c.l.b16 %v2029
    %v2108 = vunpack.c.l.b16 %v2030
    %v2109 = vunpack.c.l.b16 %v2031
    %v2110 = vunpack.c.l.b16 %v2032
    %v2111 = vpack.c.b16 %v2080, %v2079
    %v2112 = vpack.c.b16 %v2082, %v2081
    %v2113 = vpack.c.b16 %v2084, %v2083
    %v2114 = vpack.c.b16 %v2086, %v2085
    %v2115 = vpack.c.b16 %v2088, %v2087
    %v2116 = vpack.c.b16 %v2090, %v2089
    %v2117 = vpack.c.b16 %v2092, %v2091
    %v2118 = vpack.c.b16 %v2094, %v2093
    %v2119 = vpack.c.b16 %v2096, %v2095
    %v2120 = vpack.c.b16 %v2098, %v2097
    %v2121 = vpack.c.b16 %v2100, %v2099
    %v2122 = vpack.c.b16 %v2102, %v2101
    %v2123 = vpack.c.b16 %v2104, %v2103
    %v2124 = vpack.c.b16 %v2106, %v2105
    %v2125 = vpack.c.b16 %v2108, %v2107
    %v2126 = vpack.c.b16 %v2110, %v2109
    %2143 = vmatprep.subr.bf16.mxu0 0
    %2144 = vmatpush1.bf16.msra.mxu0 %v2111
    %2145 = vmatprep.subr.bf16.mxu0 0
    %2146 = vmatpush1.bf16.msra.mxu0 %v2112
    %2147 = vmatprep.subr.bf16.mxu0 0
    %2148 = vmatpush1.bf16.msra.mxu0 %v2113
    %2149 = vmatprep.subr.bf16.mxu0 0
    %2150 = vmatpush1.bf16.msra.mxu0 %v2114
    %2151 = vmatprep.subr.bf16.mxu0 0
    %2152 = vmatpush1.bf16.msra.mxu0 %v2115
    %2153 = vmatprep.subr.bf16.mxu0 0
    %2154 = vmatpush1.bf16.msra.mxu0 %v2116
    %2155 = vmatprep.subr.bf16.mxu0 0
    %2156 = vmatpush1.bf16.msra.mxu0 %v2117
    %2157 = vmatprep.subr.bf16.mxu0 0
    %2158 = vmatpush1.bf16.msra.mxu0 %v2118
    %2159 = vmatprep.subr.bf16.mxu0 0
    %2160 = vmatpush1.bf16.msra.mxu0 %v2119
    %2161 = vmatprep.subr.bf16.mxu0 0
    %2162 = vmatpush1.bf16.msra.mxu0 %v2120
    %2163 = vmatprep.subr.bf16.mxu0 0
    %2164 = vmatpush1.bf16.msra.mxu0 %v2121
    %2165 = vmatprep.subr.bf16.mxu0 0
    %2166 = vmatpush1.bf16.msra.mxu0 %v2122
    %2167 = vmatprep.subr.bf16.mxu0 0
    %2168 = vmatpush1.bf16.msra.mxu0 %v2123
    %2169 = vmatprep.subr.bf16.mxu0 0
    %2170 = vmatpush1.bf16.msra.mxu0 %v2124
    %2171 = vmatprep.subr.bf16.mxu0 0
    %2172 = vmatpush1.bf16.msra.mxu0 %v2125
    %2173 = vmatprep.subr.bf16.mxu0 0
    %2174 = vmatpush1.bf16.msra.mxu0 %v2126
    %2175 = vmatprep.mubr.bf16.mxu0 %v2044
    %2176 = vmatmul.mubr.bf16.gmra.mrb[0].mxu0 %v2043
    %v2177 = vpop.f32.mrb[0].mxu0
    %v2178 = vadd.f32 %v2038, %v2177
    %v2179 = vpop.f32.mrb[0].mxu0
    %v2180 = vpop.f32.mrb[0].mxu0
    %v2181 = vpop.f32.mrb[0].mxu0
    %2182 = vdwg.mxu0
    %v2183 = vmax.f32 %v2178, 0.0
    %v2184 = vpack.c.bf16 %v2183, %v2183
    %v2185 = vld [vmem:[#allocation9] sm:$0xf]
    %v2186 = vld [vmem:[#allocation9 + $0x4] sm:$0xf]
    %v2187 = vld [vmem:[#allocation9 + $0x8] sm:$0xf]
    %v2188 = vld [vmem:[#allocation9 + $0xc] sm:$0xf]
    %v2189 = vld [vmem:[#allocation9 + $0x10] sm:$0xf]
    %v2190 = vld [vmem:[#allocation9 + $0x14] sm:$0xf]
    %v2191 = vld [vmem:[#allocation9 + $0x18] sm:$0xf]
    %v2192 = vld [vmem:[#allocation9 + $0x1c] sm:$0xf]
    %v2193 = vld [vmem:[#allocation9 + $0x20] sm:$0xf]
    %v2194 = vld [vmem:[#allocation9 + $0x24] sm:$0xf]
    %v2195 = vld [vmem:[#allocation9 + $0x28] sm:$0xf]
    %v2196 = vld [vmem:[#allocation9 + $0x2c] sm:$0xf]
    %v2197 = vld [vmem:[#allocation9 + $0x30] sm:$0xf]
    %v2198 = vld [vmem:[#allocation9 + $0x34] sm:$0xf]
    %v2199 = vld [vmem:[#allocation9 + $0x38] sm:$0xf]
    %v2200 = vld [vmem:[#allocation9 + $0x3c] sm:$0xf]
    %v2201 = vld [vmem:[%s6] sm:$0x1]
    %v2203 = vlaneseq
    %v2204 = vshrl.u32 %v2203, 7
    %v2205 = vsub.s32 0, %v2204
    %v2206 = vrot.slane %v2201, %v2205
    %v2224 = vunpack.c.l.b16 %v2185
    %v2225 = vunpack.c.l.b16 %v2186
    %v2226 = vunpack.c.l.b16 %v2187
    %v2227 = vunpack.c.l.b16 %v2188
    %v2228 = vunpack.c.l.b16 %v2189
    %v2229 = vunpack.c.l.b16 %v2190
    %v2230 = vunpack.c.l.b16 %v2191
    %v2231 = vunpack.c.l.b16 %v2192
    %v2232 = vunpack.c.l.b16 %v2193
    %v2233 = vunpack.c.l.b16 %v2194
    %v2234 = vunpack.c.l.b16 %v2195
    %v2235 = vunpack.c.l.b16 %v2196
    %v2236 = vunpack.c.l.b16 %v2197
    %v2237 = vunpack.c.l.b16 %v2198
    %v2238 = vunpack.c.l.b16 %v2199
    %v2239 = vunpack.c.l.b16 %v2200
    %v2240 = vpack.c.b16 %v2225, %v2224
    %v2241 = vpack.c.b16 %v2227, %v2226
    %v2242 = vpack.c.b16 %v2229, %v2228
    %v2243 = vpack.c.b16 %v2231, %v2230
    %v2244 = vpack.c.b16 %v2233, %v2232
    %v2245 = vpack.c.b16 %v2235, %v2234
    %v2246 = vpack.c.b16 %v2237, %v2236
    %v2247 = vpack.c.b16 %v2239, %v2238
    %2256 = vmatprep.subr.bf16.mxu0 0
    %2257 = vmatpush1.bf16.msra.mxu0 %v2240
    %2258 = vmatprep.subr.bf16.mxu0 0
    %2259 = vmatpush1.bf16.msra.mxu0 %v2241
    %2260 = vmatprep.subr.bf16.mxu0 0
    %2261 = vmatpush1.bf16.msra.mxu0 %v2242
    %2262 = vmatprep.subr.bf16.mxu0 0
    %2263 = vmatpush1.bf16.msra.mxu0 %v2243
    %2264 = vmatprep.subr.bf16.mxu0 0
    %2265 = vmatpush1.bf16.msra.mxu0 %v2244
    %2266 = vmatprep.subr.bf16.mxu0 0
    %2267 = vmatpush1.bf16.msra.mxu0 %v2245
    %2268 = vmatprep.subr.bf16.mxu0 0
    %2269 = vmatpush1.bf16.msra.mxu0 %v2246
    %2270 = vmatprep.subr.bf16.mxu0 0
    %2271 = vmatpush1.bf16.msra.mxu0 %v2247
    %2272 = vmatprep.subr.bf16.mxu0 0
    %2273 = vmatpush1.bf16.msra.mxu0 0
    %2274 = vmatprep.subr.bf16.mxu0 0
    %2275 = vmatpush1.bf16.msra.mxu0 0
    %2276 = vmatprep.subr.bf16.mxu0 0
    %2277 = vmatpush1.bf16.msra.mxu0 0
    %2278 = vmatprep.subr.bf16.mxu0 0
    %2279 = vmatpush1.bf16.msra.mxu0 0
    %2280 = vmatprep.subr.bf16.mxu0 0
    %2281 = vmatpush1.bf16.msra.mxu0 0
    %2282 = vmatprep.subr.bf16.mxu0 0
    %2283 = vmatpush1.bf16.msra.mxu0 0
    %2284 = vmatprep.subr.bf16.mxu0 0
    %2285 = vmatpush1.bf16.msra.mxu0 0
    %2286 = vmatprep.subr.bf16.mxu0 0
    %2287 = vmatpush1.bf16.msra.mxu0 0
    %2288 = vmatprep.mubr.bf16.mxu0 0
    %2289 = vmatmul.mubr.bf16.gmra.mrb[0].mxu0 %v2184
    %v2290 = vpop.f32.mrb[0].mxu0
    %v2291 = vadd.f32 %v2206, %v2290
    %v2292 = vpop.f32.mrb[0].mxu0
    %v2293 = vpop.f32.mrb[0].mxu0
    %v2294 = vpop.f32.mrb[0].mxu0
    %2295 = vdwg.mxu0
    %2296 = vst [vmem:[#allocation11] sm:$0xff] %v2291
    // Predicated region
    $region46: #{triplet_network_forward.1} parent=1 // pred_check
      _
    $region47: #{triplet_network_forward.1} parent=1 // pred_check_branch
      %2298 = sbr.rel (0) target = $region49
    $region48: #{triplet_network_forward.1} parent=1 // pred_region
      %s2300 = ssub.s32 128, 128
      %2301 = vsyncadd [#allocation5], %s2300
      %s2303 = sshll.u32 [#allocation11], 4
      %s2304 = int_to_ptr.vmem [resolvable:$true] %s2303
      %2306 = dma.vmem_to_hbm [thread:$0]  %s2304, 128, %s7, [#allocation5]
    $region49: #{triplet_network_forward.1} parent=1 // pred_fallthru
      _
    // Predicated region
    $region50: #{triplet_network_forward.1} parent=1 // pred_check
      _
    $region51: #{triplet_network_forward.1} parent=1 // pred_check_branch
      %2308 = sbr.rel (0) target = $region53
    $region52: #{triplet_network_forward.1} parent=1 // pred_region
      %2309 = dma.done [#allocation5], 128
    $region53: #{triplet_network_forward.1} parent=1 // pred_fallthru
      _
    %2310 = vsyncpa [#allocation4], 1
    %2311 = vsyncpa [#allocation7], 1
    %2312 = vsyncpa [#allocation10], 1
    %2313 = vsyncpa [#allocation5], 1

</llo_original>
